<compile_context>
chip_gen: v7x
topology: tpu7x:2x2x1
jax: 0.10.0
libtpu: 0.0.40
codegen_flags: <defaults>
</compile_context>

<pallas_src>
import functools

import jax
import jax.numpy as jnp
from jax.experimental import pallas as pl
from jax.experimental.pallas import tpu as pltpu

HB = 128  # halo block width == one lane tile


def _sepconv1d_kernel(*refs, K, P, L, TL, has_left, has_right, mask_main, precision):
    it = iter(refs)
    xm_ref = next(it)                          # (1, C, TL)  main input tile, starts at t*TL
    xl_ref = next(it) if has_left else None    # (1, C, HB)  previous 128 input cols (clamped)
    xr_ref = next(it) if has_right else None   # (1, C, HB)  next 128 input cols (clamped)
    wf_ref = next(it)                          # (K, O, C)   folded depthwise*pointwise weights
    o_ref = next(it)                           # (1, O, TL)  output tile

    t = pl.program_id(1)
    rpad = K - 1 - P

    xm = xm_ref[0]                             # (C, TL)
    if mask_main:
        # Only emitted when the last main block can contain columns past L (static check).
        jm = jax.lax.broadcasted_iota(jnp.int32, (1, TL), 1)
        xm = jnp.where(t * TL + jm < L, xm, jnp.zeros_like(xm))

    xl_p = None
    if has_left:
        xl_p = xl_ref[0, :, HB - P:]           # (C, P): intended global cols [t*TL - P, t*TL)
        jl = jax.lax.broadcasted_iota(jnp.int32, (1, P), 1)
        gl = t * TL - P + jl
        xl_p = jnp.where((gl >= 0) & (gl < L), xl_p, jnp.zeros_like(xl_p))

    xr_p = None
    if has_right:
        xr_p = xr_ref[0, :, :rpad]             # (C, rpad): intended cols [(t+1)*TL, ...+rpad)
        jr = jax.lax.broadcasted_iota(jnp.int32, (1, rpad), 1)
        gr = (t + 1) * TL + jr
        xr_p = jnp.where(gr < L, xr_p, jnp.zeros_like(xr_p))

    wf = wf_ref[...]                           # (K, O, C) — tiny, resident
    acc = None
    for k in range(K):                         # K accumulated matmuls; f32 accumulate on MXU
        s = k - P                              # shift of this tap relative to the output col
        if s == 0:
            view = xm
        elif s < 0:
            view = jnp.concatenate([xl_p[:, P + s:], xm[:, :TL + s]], axis=-1)
        else:
            view = jnp.concatenate([xm[:, s:], xr_p[:, :s]], axis=-1)
        contrib = jnp.dot(wf[k], view, preferred_element_type=jnp.float32,
                          precision=precision)                      # (O, TL)
        acc = contrib if acc is None else acc + contrib
    o_ref[0] = acc.astype(o_ref.dtype)


def separable_conv1d(x, w_dw, w_pw, *, padding, tl=1024, precision=None):
    """x: (N, C, L); w_dw: (C, 1, K) depthwise; w_pw: (O, C, 1) pointwise -> (N, O, L_out)."""
    N, C, L = x.shape
    K = w_dw.shape[-1]
    O = w_pw.shape[0]
    P = int(padding)
    rpad = K - 1 - P
    L_out = L + 2 * P - (K - 1)                # stride=1, dilation=1
    assert L_out >= 1, "non-positive output length"
    assert 0 <= P <= HB and rpad <= HB, "halo wider than one 128-lane block"

    itemsize = jnp.dtype(x.dtype).itemsize
    has_left = P > 0
    has_right = rpad > 0
    n_halo = int(has_left) + int(has_right)

    # ---- choose the length tile TL (multiple of 128) ------------------------------------
    TL = max(HB, (int(tl) // HB) * HB)
    TL = min(TL, HB * pl.cdiv(L_out, HB))      # don't allocate beyond what L_out needs

    def step_bytes(t_):                        # double-buffered per-step input+output bytes
        return 2 * (C * t_ + C * HB * n_halo + O * t_) * itemsize

    VMEM_BUDGET = 16 << 20                     # v7x-safe (64 MiB physical / 32 MiB scoped)
    while TL > HB and step_bytes(TL) > VMEM_BUDGET:
        TL = HB * max(1, (TL // HB) // 2)
    # v7x megacore: with a single batch row, keep at least 2 parallel grid steps.
    if N == 1 and pl.cdiv(L_out, TL) == 1 and L_out > HB:
        TL = HB * pl.cdiv(pl.cdiv(L_out, 2), HB)

    tlb = TL // HB
    nt = pl.cdiv(L_out, TL)                    # number of length tiles
    nmb = max(pl.cdiv(L, TL), 1)               # existing TL-blocks in x
    nlb = max(pl.cdiv(L, HB), 1)               # existing 128-blocks in x
    assert nmb * TL >= L and nlb * HB >= L     # clamped-halo invariant (see header comment)
    mask_main = (L % TL != 0) or (nt > nmb)    # static: main tile can hold cols >= L?

    # Fold depthwise into pointwise: wf[k, o, c] = w_pw[o, c] * w_dw[c, k]
    wf = (w_pw[:, :, 0][None, :, :] * jnp.transpose(w_dw[:, 0, :])[:, None, :]).astype(x.dtype)
    # TODO(synk): for production-sized C/O, zero-pad C to the MXU depth (128/256) and O to a
    # sublane multiple here to avoid partial systolic-array passes.

    kernel = functools.partial(
        _sepconv1d_kernel, K=K, P=P, L=L, TL=TL,
        has_left=has_left, has_right=has_right, mask_main=mask_main, precision=precision)

    in_specs = [pl.BlockSpec((1, C, TL), lambda n, t: (n, 0, jnp.clip(t, 0, nmb - 1)))]
    operands = [x]
    if has_left:
        in_specs.append(pl.BlockSpec(
            (1, C, HB), lambda n, t: (n, 0, jnp.clip(t * tlb - 1, 0, nlb - 1))))
        operands.append(x)
    if has_right:
        in_specs.append(pl.BlockSpec(
            (1, C, HB), lambda n, t: (n, 0, jnp.clip((t + 1) * tlb, 0, nlb - 1))))
        operands.append(x)
    in_specs.append(pl.BlockSpec((K, O, C), lambda n, t: (0, 0, 0)))
    operands.append(wf)

    wf_bytes = K * O * C * itemsize
    vmem_limit = int(min(max(step_bytes(TL) + 2 * wf_bytes + (4 << 20), 8 << 20), 32 << 20))

    return pl.pallas_call(
        kernel,
        out_shape=jax.ShapeDtypeStruct((N, O, L_out), x.dtype),
        grid_spec=pltpu.PrefetchScalarGridSpec(
            num_scalar_prefetch=0,
            grid=(N, nt),
            in_specs=in_specs,
            out_specs=pl.BlockSpec((1, O, TL), lambda n, t: (n, 0, t)),
        ),
        compiler_params=pltpu.CompilerParams(
            dimension_semantics=("parallel", "parallel"),
            vmem_limit_bytes=vmem_limit),
    )(*operands)


def make_params(in_channels, out_channels, kernel_size):
    """Deterministic init mirroring the PyTorch module's __init__ (bias=False)."""
    w_dw = jnp.zeros((in_channels, 1, kernel_size), dtype=jnp.float32)
    w_dw = w_dw.at[:, :, kernel_size // 2].set(1.0)                 # identity-like depthwise
    w_pw = jnp.zeros((out_channels, in_channels, 1), dtype=jnp.float32)
    m = min(out_channels, in_channels)
    w_pw = w_pw.at[jnp.arange(m), jnp.arange(m), 0].set(1.0)        # nn.init.dirac_
    return w_dw, w_pw


def reference_forward(x, w_dw, w_pw, padding):
    """Plain-JAX reference (equivalent to the two Conv1d calls), full f32 precision."""
    N, C, L = x.shape
    K = w_dw.shape[-1]
    x_pad = jnp.pad(x, ((0, 0), (0, 0), (padding, padding)))
    L_out = L + 2 * padding - (K - 1)
    dw = jnp.zeros((N, C, L_out), dtype=jnp.float32)
    for k in range(K):
        dw = dw + w_dw[None, :, 0, k:k + 1] * x_pad[:, :, k:k + L_out]
    out = jnp.einsum('oc,ncl->nol', w_pw[:, :, 0], dw,
                     precision=jax.lax.Precision.HIGHEST)
    return out.astype(x.dtype)


if __name__ == "__main__":
    key = jax.random.PRNGKey(0)

    # (N, C, O, L, K, PAD, tl, use_module_init)
    cases = [
        (2, 4, 8, 256, 3, 1, 1024, True),   # default tile: whole L in one tile, module init
        (2, 4, 8, 256, 3, 1, 128,  False),  # forced multi-tile: seams + both halos
        (2, 4, 8, 16,  3, 1, 512,  False),  # tiny L, single partial tile
        (2, 6, 8, 300, 5, 2, 256,  False),  # ragged length, K=5, multi-tile
        (2, 4, 8, 64,  1, 0, 1024, False),  # module defaults: K=1, P=0 -> no halo inputs
        (1, 4, 8, 512, 3, 1, 1024, False),  # N==1: TL auto-split keeps both v7x cores busy
    ]
    for idx, (N, C, O, L, K, PAD, TL_REQ, module_init) in enumerate(cases):
        kx, kw1, kw2, key = jax.random.split(key, 4)
        x = jax.random.normal(kx, (N, C, L), dtype=jnp.float32)
        if module_init:
            w_dw, w_pw = make_params(C, O, K)
        else:
            w_dw = jax.random.normal(kw1, (C, 1, K), dtype=jnp.float32)
            w_pw = jax.random.normal(kw2, (O, C, 1), dtype=jnp.float32)

        ref = reference_forward(x, w_dw, w_pw, PAD)

        # Exact-path check (HIGHEST precision): verifies halo / mask / seam indexing tightly.
        out_hi = jax.block_until_ready(separable_conv1d(
            x, w_dw, w_pw, padding=PAD, tl=TL_REQ, precision=jax.lax.Precision.HIGHEST))
        assert out_hi.shape == ref.shape, (idx, out_hi.shape, ref.shape)
        assert jnp.allclose(out_hi, ref, atol=1e-4, rtol=1e-4), f"case {idx}: HIGHEST mismatch"

        # Default-precision path (the fast production default): loose tolerance covers
        # possible bf16 MXU passes on f32 operands.
        out_def = jax.block_until_ready(separable_conv1d(
            x, w_dw, w_pw, padding=PAD, tl=TL_REQ))
        assert out_def.shape == ref.shape, (idx, out_def.shape, ref.shape)
        assert jnp.allclose(out_def, ref, atol=1e-1, rtol=1e-1), f"case {idx}: DEFAULT mismatch"

    print("KERNEL_OK")
</pallas_src>

<mosaic_0001>
module attributes {stable_mosaic.version = 11 : i64} {
  func.func @_sepconv1d_kernel(%arg0: i32, %arg1: i32, %arg2: memref<1x4x256xf32, #tpu.memory_space<vmem>>, %arg3: memref<1x4x128xf32, #tpu.memory_space<vmem>>, %arg4: memref<1x4x128xf32, #tpu.memory_space<vmem>>, %arg5: memref<3x8x4xf32, #tpu.memory_space<vmem>>, %arg6: memref<1x8x256xf32, #tpu.memory_space<vmem>>) attributes {dimension_semantics = [#tpu.dimension_semantics<parallel>, #tpu.dimension_semantics<parallel>], iteration_bounds = array<i64: 2, 1>, scalar_prefetch = 0 : i64, scratch_operands = 0 : i64, tpu.core_type = #tpu.core_type<tc>, window_params = [{transform_indices = @transform_0, window_bounds = array<i64: 1, 4, 256>}, {transform_indices = @transform_1, window_bounds = array<i64: 1, 4, 128>}, {transform_indices = @transform_2, window_bounds = array<i64: 1, 4, 128>}, {pipeline_mode = #tpu.pipeline_mode<synchronous>, transform_indices = @transform_3, window_bounds = array<i64: 3, 8, 4>}, {transform_indices = @transform_4, window_bounds = array<i64: 1, 8, 256>}]} {
    %c0 = arith.constant 0 : index
    %c0_0 = arith.constant 0 : index
    %c0_1 = arith.constant 0 : index
    %0 = vector.load %arg2[%c0, %c0_0, %c0_1] : memref<1x4x256xf32, #tpu.memory_space<vmem>>, vector<1x4x256xf32>
    %1 = vector.shape_cast %0 : vector<1x4x256xf32> to vector<4x256xf32>
    %c0_2 = arith.constant 0 : index
    %c0_3 = arith.constant 0 : index
    %c127 = arith.constant 127 : index
    %2 = vector.load %arg3[%c0_2, %c0_3, %c127] : memref<1x4x128xf32, #tpu.memory_space<vmem>>, vector<1x4x1xf32>
    %3 = vector.shape_cast %2 : vector<1x4x1xf32> to vector<4x1xf32>
    %4 = tpu.iota {dimensions = array<i32: 1>} : vector<1x1xi32>
    %c256_i32 = arith.constant 256 : i32
    %5 = arith.muli %arg1, %c256_i32 : i32
    %c1_i32 = arith.constant 1 : i32
    %6 = arith.subi %5, %c1_i32 : i32
    %7 = vector.broadcast %6 : i32 to vector<1x1xi32>
    %8 = arith.addi %7, %4 : vector<1x1xi32>
    %c0_i32 = arith.constant 0 : i32
    %9 = vector.broadcast %c0_i32 : i32 to vector<1x1xi32>
    %10 = arith.cmpi sge, %8, %9 : vector<1x1xi32>
    %c256_i32_4 = arith.constant 256 : i32
    %11 = vector.broadcast %c256_i32_4 : i32 to vector<1x1xi32>
    %12 = arith.cmpi slt, %8, %11 : vector<1x1xi32>
    %13 = arith.andi %10, %12 : vector<1x1xi1>
    %cst = arith.constant 0.000000e+00 : f32
    %14 = vector.broadcast %cst : f32 to vector<4x1xf32>
    %15 = vector.shape_cast %13 : vector<1x1xi1> to vector<1x1xi1>
    %16 = vector.broadcast %15 : vector<1x1xi1> to vector<4x1xi1>
    %17 = arith.select %16, %3, %14 : vector<4x1xi1>, vector<4x1xf32>
    %c0_5 = arith.constant 0 : index
    %c0_6 = arith.constant 0 : index
    %c0_7 = arith.constant 0 : index
    %18 = vector.load %arg4[%c0_5, %c0_6, %c0_7] : memref<1x4x128xf32, #tpu.memory_space<vmem>>, vector<1x4x1xf32>
    %19 = vector.shape_cast %18 : vector<1x4x1xf32> to vector<4x1xf32>
    %20 = tpu.iota {dimensions = array<i32: 1>} : vector<1x1xi32>
    %c1_i32_8 = arith.constant 1 : i32
    %21 = arith.addi %arg1, %c1_i32_8 : i32
    %c256_i32_9 = arith.constant 256 : i32
    %22 = arith.muli %21, %c256_i32_9 : i32
    %23 = vector.broadcast %22 : i32 to vector<1x1xi32>
    %24 = arith.addi %23, %20 : vector<1x1xi32>
    %c256_i32_10 = arith.constant 256 : i32
    %25 = vector.broadcast %c256_i32_10 : i32 to vector<1x1xi32>
    %26 = arith.cmpi slt, %24, %25 : vector<1x1xi32>
    %cst_11 = arith.constant 0.000000e+00 : f32
    %27 = vector.broadcast %cst_11 : f32 to vector<4x1xf32>
    %28 = vector.shape_cast %26 : vector<1x1xi1> to vector<1x1xi1>
    %29 = vector.broadcast %28 : vector<1x1xi1> to vector<4x1xi1>
    %30 = arith.select %29, %19, %27 : vector<4x1xi1>, vector<4x1xf32>
    %c0_12 = arith.constant 0 : index
    %c0_13 = arith.constant 0 : index
    %c0_14 = arith.constant 0 : index
    %31 = vector.load %arg5[%c0_12, %c0_13, %c0_14] : memref<3x8x4xf32, #tpu.memory_space<vmem>>, vector<3x8x4xf32>
    %32 = vector.extract_strided_slice %1 {offsets = [0, 0], sizes = [4, 255], strides = [1, 1]} : vector<4x256xf32> to vector<4x255xf32>
    %33 = tpu.concatenate %17, %32 in 1 : vector<4x1xf32>, vector<4x255xf32> -> vector<4x256xf32>
    %34 = vector.extract_strided_slice %31 {offsets = [0, 0, 0], sizes = [1, 8, 4], strides = [1, 1, 1]} : vector<3x8x4xf32> to vector<1x8x4xf32>
    %35 = vector.shape_cast %34 : vector<1x8x4xf32> to vector<8x4xf32>
    %cst_15 = arith.constant dense<0.000000e+00> : vector<8x256xf32>
    %36 = tpu.matmul %35, %33, %cst_15 {dimension_numbers = #tpu.dot_dimension_numbers<[1], [0], [0], [1], [0, 0, 1, 1], [], []>, precision = #tpu.contract_precision<fp32>} : vector<8x4xf32>, vector<4x256xf32>, vector<8x256xf32> -> vector<8x256xf32>
    %37 = vector.extract_strided_slice %31 {offsets = [1, 0, 0], sizes = [1, 8, 4], strides = [1, 1, 1]} : vector<3x8x4xf32> to vector<1x8x4xf32>
    %38 = vector.shape_cast %37 : vector<1x8x4xf32> to vector<8x4xf32>
    %cst_16 = arith.constant dense<0.000000e+00> : vector<8x256xf32>
    %39 = tpu.matmul %38, %1, %cst_16 {dimension_numbers = #tpu.dot_dimension_numbers<[1], [0], [0], [1], [0, 0, 1, 1], [], []>, precision = #tpu.contract_precision<fp32>} : vector<8x4xf32>, vector<4x256xf32>, vector<8x256xf32> -> vector<8x256xf32>
    %40 = arith.addf %36, %39 : vector<8x256xf32>
    %41 = vector.extract_strided_slice %1 {offsets = [0, 1], sizes = [4, 255], strides = [1, 1]} : vector<4x256xf32> to vector<4x255xf32>
    %42 = tpu.concatenate %41, %30 in 1 : vector<4x255xf32>, vector<4x1xf32> -> vector<4x256xf32>
    %43 = vector.extract_strided_slice %31 {offsets = [2, 0, 0], sizes = [1, 8, 4], strides = [1, 1, 1]} : vector<3x8x4xf32> to vector<1x8x4xf32>
    %44 = vector.shape_cast %43 : vector<1x8x4xf32> to vector<8x4xf32>
    %cst_17 = arith.constant dense<0.000000e+00> : vector<8x256xf32>
    %45 = tpu.matmul %44, %42, %cst_17 {dimension_numbers = #tpu.dot_dimension_numbers<[1], [0], [0], [1], [0, 0, 1, 1], [], []>, precision = #tpu.contract_precision<fp32>} : vector<8x4xf32>, vector<4x256xf32>, vector<8x256xf32> -> vector<8x256xf32>
    %46 = arith.addf %40, %45 : vector<8x256xf32>
    %c0_18 = arith.constant 0 : index
    %c0_19 = arith.constant 0 : index
    %c0_20 = arith.constant 0 : index
    %47 = vector.load %arg6[%c0_18, %c0_19, %c0_20] : memref<1x8x256xf32, #tpu.memory_space<vmem>>, vector<1x8x256xf32>
    %48 = vector.shape_cast %47 : vector<1x8x256xf32> to vector<8x256xf32>
    %49 = vector.shape_cast %46 : vector<8x256xf32> to vector<1x8x256xf32>
    tpu.vector_store %arg6[%c0_18, %c0_19, %c0_20], %49 {strides = array<i32>} : memref<1x8x256xf32, #tpu.memory_space<vmem>>, vector<1x8x256xf32>,
    return
  }
  func.func @transform_0(%arg0: i32, %arg1: i32) -> (i32, i32, i32) {
    %c0_i32 = arith.constant 0 : i32
    %c0_i32_0 = arith.constant 0 : i32
    %0 = arith.maxsi %c0_i32, %arg1 : i32
    %1 = arith.minsi %c0_i32_0, %0 : i32
    %c0_i32_1 = arith.constant 0 : i32
    %c0_i32_2 = arith.constant 0 : i32
    return %arg0, %c0_i32_1, %1 : i32, i32, i32
  }
  func.func @transform_1(%arg0: i32, %arg1: i32) -> (i32, i32, i32) {
    %c2_i32 = arith.constant 2 : i32
    %0 = arith.muli %arg1, %c2_i32 : i32
    %c1_i32 = arith.constant 1 : i32
    %1 = arith.subi %0, %c1_i32 : i32
    %c0_i32 = arith.constant 0 : i32
    %c1_i32_0 = arith.constant 1 : i32
    %2 = arith.maxsi %c0_i32, %1 : i32
    %3 = arith.minsi %c1_i32_0, %2 : i32
    %c0_i32_1 = arith.constant 0 : i32
    %c0_i32_2 = arith.constant 0 : i32
    return %arg0, %c0_i32_1, %3 : i32, i32, i32
  }
  func.func @transform_2(%arg0: i32, %arg1: i32) -> (i32, i32, i32) {
    %c1_i32 = arith.constant 1 : i32
    %0 = arith.addi %arg1, %c1_i32 : i32
    %c2_i32 = arith.constant 2 : i32
    %1 = arith.muli %0, %c2_i32 : i32
    %c0_i32 = arith.constant 0 : i32
    %c1_i32_0 = arith.constant 1 : i32
    %2 = arith.maxsi %c0_i32, %1 : i32
    %3 = arith.minsi %c1_i32_0, %2 : i32
    %c0_i32_1 = arith.constant 0 : i32
    %c0_i32_2 = arith.constant 0 : i32
    return %arg0, %c0_i32_1, %3 : i32, i32, i32
  }
  func.func @transform_3(%arg0: i32, %arg1: i32) -> (i32, i32, i32) {
    %c0_i32 = arith.constant 0 : i32
    %c0_i32_0 = arith.constant 0 : i32
    %c0_i32_1 = arith.constant 0 : i32
    %c0_i32_2 = arith.constant 0 : i32
    return %c0_i32, %c0_i32_0, %c0_i32_1 : i32, i32, i32
  }
  func.func @transform_4(%arg0: i32, %arg1: i32) -> (i32, i32, i32) {
    %c0_i32 = arith.constant 0 : i32
    %c0_i32_0 = arith.constant 0 : i32
    return %arg0, %c0_i32, %arg1 : i32, i32, i32
  }
}

</mosaic_0001>

<llo_original>
// kernel: tpu_custom_call.1
$region0: #{tpu_custom_call.1}
  #allocation0 [shape = 'u32[]', space=smem, size = 0x4, offset = 0x4, fixed_abs, tag = 'smem constant byte address 0x4 - core index']
  #allocation1 [shape = 'u32[144,128]{1,0:T(1,128)}', space=vmem, size = 0x12000, scoped, tag = 'internal scratch']
  %s0 = inlined_call_operand.vmem [shape: f32[2,4,256], index: 0, kind: input, shape index: {}]
  %s1 = inlined_call_operand.vmem [shape: f32[2,4,256], index: 1, kind: input, shape index: {}]
  %s2 = inlined_call_operand.hbm [shape: f32[2,4,256], index: 2, kind: input, shape index: {}]
  %s3 = inlined_call_operand.vmem [shape: f32[3,8,4], index: 3, kind: input, shape index: {}]
  %s4 = inlined_call_operand.hbm [shape: f32[2,8,256], index: 4, kind: output, shape index: {}]
  %s5 = sld [smem:[#allocation0]]
  $region53: #{tpu_custom_call.1} parent=0
    _
  %s7 = ssub.s32 1, %s5
  %s8 = scalar_select 0, %s7, %s5
  $region1: #{tpu_custom_call.1} parent=0
    #allocation2 [shape = 'u8[4096]{0}', space=vmem, size = 0x1000, scoped, tag = 'input window, operand 2']
    #allocation3 [shape = 's32[2]{0}', space=sflag, size = 0x8, scoped, tag = 'scoped memory for tpu_custom_call.1']
    #allocation4 [shape = 's32[2]{0}', space=sflag, size = 0x8, scoped, tag = 'scoped memory for tpu_custom_call.1']
    #allocation5 [shape = 'u8[16384]{0}', space=vmem, size = 0x4000, scoped, tag = 'output window, operand 0']
    %9 = vsyncpa [#allocation3], 0
    %s10 = scalar_lea.sflag [#allocation3], 1
    %11 = vsyncpa %s10, 0
    %12 = vsyncpa [#allocation4], 0
    %s13 = scalar_lea.sflag [#allocation4], 1
    %14 = vsyncpa %s13, 0
    loop: start=0, step=1, limit=4
    $region2: #{tpu_custom_call.1} parent=1 // loop_pre_header
      _
    $region3: #{tpu_custom_call.1} parent=1 // loop_header
      %s16 = sphi 0, %s20
      %p17 = scmp.ge.s32.totalorder %s16, 4
      %s23 = sphi 0, %s35
      %s24 = sphi 0, %s31
      %s25 = sphi 0, %s23
      %s26 = sphi 0, %s24
      %s27 = sphi 0, %s25
      %s28 = sphi 0, %s26
      %s48 = sphi 0, %s50
      %s51 = sphi 0, %s48
      %s52 = sphi 0, %s51
      %s68 = sphi 0, %s52
      %s88 = sphi 0, %s90
      %s91 = sphi 0, %s88
      %s92 = sphi 0, %s91
      %s108 = sphi 0, %s92
      %s128 = sphi 0, %s130
      %s131 = sphi 0, %s128
      %s132 = sphi 0, %s131
      %s148 = sphi 0, %s132
      %s152 = sphi 0, %s152
      %s154 = sphi 0, %s152
      %s155 = sphi 0, %s154
      %s169 = sphi 0, %s155
      %s177 = sphi 0, %s179
      %s180 = sphi 0, %s177
      %s181 = sphi 0, %s180
      %s197 = sphi 0, %s181
    $region4: #{tpu_custom_call.1} parent=1 // loop_header_branch
      %19 = sbr.rel (%p17) target = $region8
    $region5: #{tpu_custom_call.1} parent=1 // loop_body
      %s21 = ssub.s32 %s16, 1
      %s22 = ssub.s32 %s16, 2
      %s29 = sadd.s32 1, %s24
      %p30 = scmp.ge.s32.totalorder %s29, 1
      %s31 = scalar_select %p30, 0, %s29
      %s32 = sadd.s32 1, %s23
      %s33 = scalar_select %p30, %s32, %s23
      %p34 = scmp.ge.s32.totalorder %s33, 2
      %s35 = scalar_select %p34, 0, %s33
      %p36 = scmp.gt.s32.totalorder %s24, 0
      %s37 = scalar_select %p36, %s24, 0
      %p38 = scmp.lt.s32.totalorder %s37, 0
      %s39 = scalar_select %p38, %s37, 0
      %p40 = scmp.gt.s32.totalorder %s31, 0
      %s41 = scalar_select %p40, %s31, 0
      %p42 = scmp.lt.s32.totalorder %s41, 0
      %s43 = scalar_select %p42, %s41, 0
      %s44 = ssub.s32 %s23, %s35
      %s45 = ssub.s32 %s39, %s43
      %s46 = sor.u32 %s44, %s45
      %p47 = scmp.eq.s32.totalorder %s46, 0
      %s49 = sadd.s32 %s48, 1
      %s50 = scalar_select %p47, %s48, %s49
      %p53 = pneg %p47
      %p54 = scmp.eq.s32.totalorder %s16, 1
      %p55 = por %p53, %p54
      %p56 = scmp.ne.s32.totalorder %s48, %s51
      %p57 = scmp.eq.s32.totalorder %s16, 0
      %p58 = por %p56, %p57
      %p59 = scmp.ne.s32.totalorder %s48, %s51
      %p60 = scmp.eq.s32.totalorder %s21, 1
      %p61 = por %p59, %p60
      %p62 = scmp.ne.s32.totalorder %s51, %s52
      %p63 = scmp.eq.s32.totalorder %s21, 0
      %p64 = por %p62, %p63
      %p65 = scmp.ne.s32.totalorder %s51, %s52
      %p66 = scmp.eq.s32.totalorder %s22, 1
      %p67 = por %p65, %p66
      %p69 = scmp.ne.s32.totalorder %s52, %s68
      %p70 = scmp.eq.s32.totalorder %s22, 0
      %p71 = por %p69, %p70
      %s72 = smul.u32 %s24, 2
      %s73 = ssub.s32 %s72, 1
      %p74 = scmp.gt.s32.totalorder %s73, 0
      %s75 = scalar_select %p74, %s73, 0
      %p76 = scmp.lt.s32.totalorder %s75, 1
      %s77 = scalar_select %p76, %s75, 1
      %s78 = smul.u32 %s31, 2
      %s79 = ssub.s32 %s78, 1
      %p80 = scmp.gt.s32.totalorder %s79, 0
      %s81 = scalar_select %p80, %s79, 0
      %p82 = scmp.lt.s32.totalorder %s81, 1
      %s83 = scalar_select %p82, %s81, 1
      %s84 = ssub.s32 %s23, %s35
      %s85 = ssub.s32 %s77, %s83
      %s86 = sor.u32 %s84, %s85
      %p87 = scmp.eq.s32.totalorder %s86, 0
      %s89 = sadd.s32 %s88, 1
      %s90 = scalar_select %p87, %s88, %s89
      %p93 = pneg %p87
      %p94 = scmp.eq.s32.totalorder %s16, 1
      %p95 = por %p93, %p94
      %p96 = scmp.ne.s32.totalorder %s88, %s91
      %p97 = scmp.eq.s32.totalorder %s16, 0
      %p98 = por %p96, %p97
      %p99 = scmp.ne.s32.totalorder %s88, %s91
      %p100 = scmp.eq.s32.totalorder %s21, 1
      %p101 = por %p99, %p100
      %p102 = scmp.ne.s32.totalorder %s91, %s92
      %p103 = scmp.eq.s32.totalorder %s21, 0
      %p104 = por %p102, %p103
      %p105 = scmp.ne.s32.totalorder %s91, %s92
      %p106 = scmp.eq.s32.totalorder %s22, 1
      %p107 = por %p105, %p106
      %p109 = scmp.ne.s32.totalorder %s92, %s108
      %p110 = scmp.eq.s32.totalorder %s22, 0
      %p111 = por %p109, %p110
      %s112 = sadd.s32 %s24, 1
      %s113 = smul.u32 %s112, 2
      %p114 = scmp.gt.s32.totalorder %s113, 0
      %s115 = scalar_select %p114, %s113, 0
      %p116 = scmp.lt.s32.totalorder %s115, 1
      %s117 = scalar_select %p116, %s115, 1
      %s118 = sadd.s32 %s31, 1
      %s119 = smul.u32 %s118, 2
      %p120 = scmp.gt.s32.totalorder %s119, 0
      %s121 = scalar_select %p120, %s119, 0
      %p122 = scmp.lt.s32.totalorder %s121, 1
      %s123 = scalar_select %p122, %s121, 1
      %s124 = ssub.s32 %s23, %s35
      %s125 = ssub.s32 %s117, %s123
      %s126 = sor.u32 %s124, %s125
      %p127 = scmp.eq.s32.totalorder %s126, 0
      %s129 = sadd.s32 %s128, 1
      %s130 = scalar_select %p127, %s128, %s129
      %p133 = pneg %p127
      %p134 = scmp.eq.s32.totalorder %s16, 1
      %p135 = por %p133, %p134
      %p136 = scmp.ne.s32.totalorder %s128, %s131
      %p137 = scmp.eq.s32.totalorder %s16, 0
      %p138 = por %p136, %p137
      %p139 = scmp.ne.s32.totalorder %s128, %s131
      %p140 = scmp.eq.s32.totalorder %s21, 1
      %p141 = por %p139, %p140
      %p142 = scmp.ne.s32.totalorder %s131, %s132
      %p143 = scmp.eq.s32.totalorder %s21, 0
      %p144 = por %p142, %p143
      %p145 = scmp.ne.s32.totalorder %s131, %s132
      %p146 = scmp.eq.s32.totalorder %s22, 1
      %p147 = por %p145, %p146
      %p149 = scmp.ne.s32.totalorder %s132, %s148
      %p150 = scmp.eq.s32.totalorder %s22, 0
      %p151 = por %p149, %p150
      %s153 = sadd.s32 %s152, 1
      %p156 = scmp.eq.s32.totalorder %s16, 1
      %p157 = scmp.ne.s32.totalorder %s152, %s154
      %p158 = scmp.eq.s32.totalorder %s16, 0
      %p159 = por %p157, %p158
      %p160 = scmp.ne.s32.totalorder %s152, %s154
      %p161 = scmp.eq.s32.totalorder %s21, 1
      %p162 = por %p160, %p161
      %p163 = scmp.ne.s32.totalorder %s154, %s155
      %p164 = scmp.eq.s32.totalorder %s21, 0
      %p165 = por %p163, %p164
      %p166 = scmp.ne.s32.totalorder %s154, %s155
      %p167 = scmp.eq.s32.totalorder %s22, 1
      %p168 = por %p166, %p167
      %p170 = scmp.ne.s32.totalorder %s155, %s169
      %p171 = scmp.eq.s32.totalorder %s22, 0
      %p172 = por %p170, %p171
      %s173 = ssub.s32 %s23, %s35
      %s174 = ssub.s32 %s24, %s31
      %s175 = sor.u32 %s173, %s174
      %p176 = scmp.eq.s32.totalorder %s175, 0
      %s178 = sadd.s32 %s177, 1
      %s179 = scalar_select %p176, %s177, %s178
      %p182 = pneg %p176
      %p183 = scmp.eq.s32.totalorder %s16, 1
      %p184 = por %p182, %p183
      %p185 = scmp.ne.s32.totalorder %s177, %s180
      %p186 = scmp.eq.s32.totalorder %s16, 0
      %p187 = por %p185, %p186
      %p188 = scmp.ne.s32.totalorder %s177, %s180
      %p189 = scmp.eq.s32.totalorder %s21, 1
      %p190 = por %p188, %p189
      %p191 = scmp.ne.s32.totalorder %s180, %s181
      %p192 = scmp.eq.s32.totalorder %s21, 0
      %p193 = por %p191, %p192
      %p194 = scmp.ne.s32.totalorder %s180, %s181
      %p195 = scmp.eq.s32.totalorder %s22, 1
      %p196 = por %p194, %p195
      %p198 = scmp.ne.s32.totalorder %s181, %s197
      %p199 = scmp.eq.s32.totalorder %s22, 0
      %p200 = por %p198, %p199
      %p201 = scmp.le.s32.totalorder 1, %s16
      %p202 = scmp.lt.s32.totalorder %s16, 3
      %p203 = pnand %p201, %p202
      %p204 = pneg %p203
      // Predicated region
      $region9: #{tpu_custom_call.1} parent=5 // pred_check
        _
      $region10: #{tpu_custom_call.1} parent=5 // pred_check_branch
        %206 = sbr.rel (%p203) target = $region12
      $region11: #{tpu_custom_call.1} parent=5 // pred_region
        %s207 = ssub.s32 %s16, 1
        // Predicated region
        $region13: #{tpu_custom_call.1} parent=11 // pred_check
          %p208 = pneg %p165
        $region14: #{tpu_custom_call.1} parent=11 // pred_check_branch
          %210 = sbr.rel (%p208) target = $region16
        $region15: #{tpu_custom_call.1} parent=11 // pred_region
          _
        $region16: #{tpu_custom_call.1} parent=11 // pred_fallthru
          _
      $region12: #{tpu_custom_call.1} parent=5 // pred_fallthru
        _
      %p211 = scmp.lt.s32.totalorder %s16, 2
      // Predicated region
      $region17: #{tpu_custom_call.1} parent=5 // pred_check
        %p212 = pneg %p211
      $region18: #{tpu_custom_call.1} parent=5 // pred_check_branch
        %214 = sbr.rel (%p212) target = $region20
      $region19: #{tpu_custom_call.1} parent=5 // pred_region
        // Predicated region
        $region21: #{tpu_custom_call.1} parent=19 // pred_check
          %p215 = pneg %p58
        $region22: #{tpu_custom_call.1} parent=19 // pred_check_branch
          %217 = sbr.rel (%p215) target = $region24
        $region23: #{tpu_custom_call.1} parent=19 // pred_region
          %p218 = scmp.gt.s32.totalorder %s24, 0
          %s219 = scalar_select %p218, %s24, 0
          %p220 = scmp.lt.s32.totalorder %s219, 0
          %s221 = scalar_select %p220, %s219, 0
          %s222 = smul.u32 2, %s221
          %p223 = scmp.lt.s32.totalorder %s23, 1
          %s224 = scalar_select %p223, %s23, 1
          %p225 = scmp.lt.s32.totalorder %s222, 1
          %s226 = scalar_select %p225, %s222, 1
          %s227 = smul.addr %s224, 2
          %s228 = sadd.s32 %s226, %s227
          %s229 = smul.addr %s228, 4
          %s230 = scalar_lea.vmem %s0, %s229
          %p231 = scmp.gt.s32.totalorder %s24, 0
          %s232 = scalar_select %p231, %s24, 0
          %p233 = scmp.lt.s32.totalorder %s232, 0
          %s234 = scalar_select %p233, %s232, 0
          %s235 = smul.u32 2, %s234
        $region24: #{tpu_custom_call.1} parent=19 // pred_fallthru
          _
        // Predicated region
        $region25: #{tpu_custom_call.1} parent=19 // pred_check
          %p236 = pneg %p98
        $region26: #{tpu_custom_call.1} parent=19 // pred_check_branch
          %238 = sbr.rel (%p236) target = $region28
        $region27: #{tpu_custom_call.1} parent=19 // pred_region
          %s239 = smul.u32 %s24, 2
          %s240 = ssub.s32 %s239, 1
          %p241 = scmp.gt.s32.totalorder %s240, 0
          %s242 = scalar_select %p241, %s240, 0
          %p243 = scmp.lt.s32.totalorder %s242, 1
          %s244 = scalar_select %p243, %s242, 1
          %p245 = scmp.lt.s32.totalorder %s23, 1
          %s246 = scalar_select %p245, %s23, 1
          %p247 = scmp.lt.s32.totalorder %s244, 1
          %s248 = scalar_select %p247, %s244, 1
          %s249 = smul.addr %s246, 2
          %s250 = sadd.s32 %s248, %s249
          %s251 = smul.addr %s250, 4
          %s252 = scalar_lea.vmem %s1, %s251
          %s253 = smul.u32 %s24, 2
          %s254 = ssub.s32 %s253, 1
          %p255 = scmp.gt.s32.totalorder %s254, 0
          %s256 = scalar_select %p255, %s254, 0
          %p257 = scmp.lt.s32.totalorder %s256, 1
          %s258 = scalar_select %p257, %s256, 1
        $region28: #{tpu_custom_call.1} parent=19 // pred_fallthru
          _
        // Predicated region
        $region29: #{tpu_custom_call.1} parent=19 // pred_check
          %p259 = pneg %p138
        $region30: #{tpu_custom_call.1} parent=19 // pred_check_branch
          %261 = sbr.rel (%p259) target = $region32
        $region31: #{tpu_custom_call.1} parent=19 // pred_region
          %s262 = sand.u32 %s128, 1
          %s263 = scalar_lea.sflag [#allocation3], %s262
          %s264 = sand.u32 %s128, 1
          %s265 = smul.addr %s264, 4
          %s266 = scalar_lea.vmem [#allocation2], %s265
          %s267 = sadd.s32 %s24, 1
          %s268 = smul.u32 %s267, 2
          %p269 = scmp.gt.s32.totalorder %s268, 0
          %s270 = scalar_select %p269, %s268, 0
          %p271 = scmp.lt.s32.totalorder %s270, 1
          %s272 = scalar_select %p271, %s270, 1
          %s274 = ssub.s32 64, 64
          %275 = vsyncadd %s263, %s274
          %s276 = smul.addr %s23, 2
          %s277 = sadd.s32 %s272, %s276
          %s278 = smul.addr %s277, 64
          %s279 = scalar_lea.hbm %s2, %s278
          %s281 = sshll.u32 %s266, 4
          %s282 = int_to_ptr.vmem [resolvable:$true] %s281
          %284 = dma.hbm_to_vmem [thread:$0]  %s279, 64, %s282, %s263
        $region32: #{tpu_custom_call.1} parent=19 // pred_fallthru
          _
      $region20: #{tpu_custom_call.1} parent=5 // pred_fallthru
        _
      %p285 = scmp.le.s32.totalorder 1, %s16
      %p286 = scmp.lt.s32.totalorder %s16, 3
      %p287 = pnand %p285, %p286
      %p288 = pneg %p287
      // Predicated region
      $region33: #{tpu_custom_call.1} parent=5 // pred_check
        _
      $region34: #{tpu_custom_call.1} parent=5 // pred_check_branch
        %290 = sbr.rel (%p287) target = $region36
      $region35: #{tpu_custom_call.1} parent=5 // pred_region
        %s291 = ssub.s32 %s16, 1
        %s292 = sand.u32 %s131, 1
        %s293 = scalar_lea.sflag [#allocation3], %s292
        %s294 = sand.u32 %s131, 1
        %s295 = smul.addr %s294, 4
        %s296 = scalar_lea.vmem [#allocation2], %s295
        // Predicated region
        $region37: #{tpu_custom_call.1} parent=35 // pred_check
          %p297 = pneg %p144
        $region38: #{tpu_custom_call.1} parent=35 // pred_check_branch
          %299 = sbr.rel (%p297) target = $region40
        $region39: #{tpu_custom_call.1} parent=35 // pred_region
          %300 = dma.done %s293, 64
        $region40: #{tpu_custom_call.1} parent=35 // pred_fallthru
          _
        %p301 = scmp.gt.s32.totalorder %s26, 0
        %s302 = scalar_select %p301, %s26, 0
        %p303 = scmp.lt.s32.totalorder %s302, 0
        %s304 = scalar_select %p303, %s302, 0
        %s305 = smul.u32 2, %s304
        %p306 = scmp.lt.s32.totalorder %s25, 1
        %s307 = scalar_select %p306, %s25, 1
        %p308 = scmp.lt.s32.totalorder %s305, 1
        %s309 = scalar_select %p308, %s305, 1
        %s310 = smul.addr %s307, 2
        %s311 = sadd.s32 %s309, %s310
        %s312 = smul.addr %s311, 4
        %s313 = scalar_lea.vmem %s0, %s312
        %p314 = pneg %p64
        %p315 = pneg %p61
        %s316 = smul.u32 %s26, 2
        %s317 = ssub.s32 %s316, 1
        %p318 = scmp.gt.s32.totalorder %s317, 0
        %s319 = scalar_select %p318, %s317, 0
        %p320 = scmp.lt.s32.totalorder %s319, 1
        %s321 = scalar_select %p320, %s319, 1
        %p322 = scmp.lt.s32.totalorder %s25, 1
        %s323 = scalar_select %p322, %s25, 1
        %p324 = scmp.lt.s32.totalorder %s321, 1
        %s325 = scalar_select %p324, %s321, 1
        %s326 = smul.addr %s323, 2
        %s327 = sadd.s32 %s325, %s326
        %s328 = smul.addr %s327, 4
        %s329 = scalar_lea.vmem %s1, %s328
        %p330 = pneg %p104
        %p331 = pneg %p101
        %s332 = sand.u32 %s131, 1
        %s333 = scalar_lea.sflag [#allocation3], %s332
        %s334 = sand.u32 %s131, 1
        %s335 = smul.addr %s334, 4
        %s336 = scalar_lea.vmem [#allocation2], %s335
        %p337 = pneg %p144
        %p338 = pneg %p141
        %p339 = pneg %p165
        %p340 = pneg %p162
        %p341 = pneg %p193
        %p342 = pneg %p190
        %s343 = sand.u32 %s180, 1
        %s344 = scalar_lea.sflag [#allocation4], %s343
        %s345 = sand.u32 %s180, 1
        %s346 = smul.addr %s345, 16
        %s347 = scalar_lea.vmem [#allocation5], %s346
        %p348 = scmp.gt.s32.totalorder %s26, 0
        %s349 = scalar_select %p348, %s26, 0
        %p350 = scmp.lt.s32.totalorder %s349, 0
        %s351 = scalar_select %p350, %s349, 0
        %s352 = smul.u32 2, %s351
        %p353 = scmp.lt.s32.totalorder %s25, 1
        %s354 = scalar_select %p353, %s25, 1
        %p355 = scmp.lt.s32.totalorder %s352, 1
        %s356 = scalar_select %p355, %s352, 1
        %s357 = smul.addr %s354, 2
        %s358 = sadd.s32 %s356, %s357
        %s359 = smul.addr %s358, 4
        %s360 = scalar_lea.vmem %s0, %s359
        %p361 = scmp.gt.s32.totalorder %s26, 0
        %s362 = scalar_select %p361, %s26, 0
        %p363 = scmp.lt.s32.totalorder %s362, 0
        %s364 = scalar_select %p363, %s362, 0
        %s365 = smul.u32 2, %s364
        %s366 = smul.u32 %s26, 2
        %s367 = ssub.s32 %s366, 1
        %p368 = scmp.gt.s32.totalorder %s367, 0
        %s369 = scalar_select %p368, %s367, 0
        %p370 = scmp.lt.s32.totalorder %s369, 1
        %s371 = scalar_select %p370, %s369, 1
        %p372 = scmp.lt.s32.totalorder %s25, 1
        %s373 = scalar_select %p372, %s25, 1
        %p374 = scmp.lt.s32.totalorder %s371, 1
        %s375 = scalar_select %p374, %s371, 1
        %s376 = smul.addr %s373, 2
        %s377 = sadd.s32 %s375, %s376
        %s378 = smul.addr %s377, 4
        %s379 = scalar_lea.vmem %s1, %s378
        %s380 = smul.u32 %s26, 2
        %s381 = ssub.s32 %s380, 1
        %p382 = scmp.gt.s32.totalorder %s381, 0
        %s383 = scalar_select %p382, %s381, 0
        %p384 = scmp.lt.s32.totalorder %s383, 1
        %s385 = scalar_select %p384, %s383, 1
        %s386 = sadd.s32 %s26, 1
        %s387 = smul.u32 %s386, 2
        %p388 = scmp.gt.s32.totalorder %s387, 0
        %s389 = scalar_select %p388, %s387, 0
        %p390 = scmp.lt.s32.totalorder %s389, 1
        %s391 = scalar_select %p390, %s389, 1
        %s392 = smul.u32 2, %s26
        %v393 = vld [vmem:[%s360] sm:$0xff]
        %v394 = vld [vmem:[%s379] sm:$0xf]
        %v395 = vlaneseq
        %v396 = vand.u32 %v395, 127
        %s397 = smul.u32 %s26, 256
        %s398 = ssub.s32 %s397, 1
        %v399 = vstv %s398
        %v400 = vadd.s32 %v399, %v396
        %vm401 = vcmp.ge.s32.totalorder %v400, 0
        %vm402 = vcmp.lt.s32.totalorder %v400, 256
        %vm403 = vmand %vm401, %vm402
        %v404 = vsel %vm403, 1, 0
        %vm405 = vcmp.eq.s32.totalorder %v404, 1
        %407 = vrot.lane.b32.xlu0 %v394, 1
        %v408 = vpop.permute.xlu0 %407
        %v410 = vsel %vm405, %v408, 0.0
        %v411 = vld [vmem:[%s296] sm:$0xf]
        %s412 = sadd.s32 %s26, 1
        %s413 = smul.u32 %s412, 256
        %v414 = vstv %s413
        %v415 = vadd.s32 %v414, %v396
        %vm416 = vcmp.lt.s32.totalorder %v415, 256
        %v417 = vsel %vm416, 1, 0
        %vm418 = vcmp.eq.s32.totalorder %v417, 1
        %v419 = vsel %vm418, %v411, 0.0
        %v420 = vld [vmem:[%s3] sm:$0xff]
        %v421 = vld [vmem:[%s3 + $0x8] sm:$0xff]
        %v422 = vld [vmem:[%s3 + $0x10] sm:$0xff]
        %v424 = vcombine.high %v393, %v393
        %425 = vrot.lane.b32.xlu0 %v393, 1
        %v426 = vpop.permute.xlu0 %425
        %427 = vrot.lane.b32.xlu0 %v424, 1
        %v428 = vpop.permute.xlu0 %427
        %vm429 = vcmask 7168
        %v430 = vsel %vm429, %v426, %v428
        %v432 = vsel %vm429, %v410, %v426
        %vm433 = vcmask 31744
        %v435 = vsel %vm433, %v421, 0
        %vm437 = vcmask 1043456
        %v438 = vsel %vm437, %v393, 0
        %v440 = vsel %vm437, %v424, 0
        %v442 = vand.u32 %v440, 4294901760
        %443 = vmatprep.subr.mxu0 %v442
        %v444 = vand.u32 %v438, 4294901760
        %445 = vmatpush1.msra.mxu0 %v444
        %446 = vmatprep.subr.mxu0 0.0
        %447 = vmatpush1.msra.mxu0 0.0
        %448 = vmatprep.subr.mxu0 0.0
        %449 = vmatpush1.msra.mxu0 0.0
        %450 = vmatprep.subr.mxu0 0.0
        %451 = vmatpush1.msra.mxu0 0.0
        %452 = vmatprep.subr.mxu0 0.0
        %453 = vmatpush1.msra.mxu0 0.0
        %454 = vmatprep.subr.mxu0 0.0
        %455 = vmatpush1.msra.mxu0 0.0
        %456 = vmatprep.subr.mxu0 0.0
        %457 = vmatpush1.msra.mxu0 0.0
        %458 = vmatprep.subr.mxu0 0.0
        %459 = vmatpush1.msra.mxu0 0.0
        %460 = vmatprep.subr.mxu0 0.0
        %461 = vmatpush1.msra.mxu0 0.0
        %462 = vmatprep.subr.mxu0 0.0
        %463 = vmatpush1.msra.mxu0 0.0
        %464 = vmatprep.subr.mxu0 0.0
        %465 = vmatpush1.msra.mxu0 0.0
        %466 = vmatprep.subr.mxu0 0.0
        %467 = vmatpush1.msra.mxu0 0.0
        %468 = vmatprep.subr.mxu0 0.0
        %469 = vmatpush1.msra.mxu0 0.0
        %470 = vmatprep.subr.mxu0 0.0
        %471 = vmatpush1.msra.mxu0 0.0
        %472 = vmatprep.subr.mxu0 0.0
        %473 = vmatpush1.msra.mxu0 0.0
        %474 = vmatprep.subr.mxu0 0.0
        %475 = vmatpush1.msra.mxu0 0.0
        %476 = vmatprep.subr.mxu0 0.0
        %477 = vmatpush1.msra.mxu0 0.0
        %478 = vmatprep.subr.mxu0 0.0
        %479 = vmatpush1.msra.mxu0 0.0
        %480 = vmatprep.subr.mxu0 0.0
        %481 = vmatpush1.msra.mxu0 0.0
        %482 = vmatprep.subr.mxu0 0.0
        %483 = vmatpush1.msra.mxu0 0.0
        %484 = vmatprep.subr.mxu0 0.0
        %485 = vmatpush1.msra.mxu0 0.0
        %486 = vmatprep.subr.mxu0 0.0
        %487 = vmatpush1.msra.mxu0 0.0
        %488 = vmatprep.subr.mxu0 0.0
        %489 = vmatpush1.msra.mxu0 0.0
        %490 = vmatprep.subr.mxu0 0.0
        %491 = vmatpush1.msra.mxu0 0.0
        %492 = vmatprep.subr.mxu0 0.0
        %493 = vmatpush1.msra.mxu0 0.0
        %494 = vmatprep.subr.mxu0 0.0
        %495 = vmatpush1.msra.mxu0 0.0
        %496 = vmatprep.subr.mxu0 0.0
        %497 = vmatpush1.msra.mxu0 0.0
        %498 = vmatprep.subr.mxu0 0.0
        %499 = vmatpush1.msra.mxu0 0.0
        %500 = vmatprep.subr.mxu0 0.0
        %501 = vmatpush1.msra.mxu0 0.0
        %502 = vmatprep.subr.mxu0 0.0
        %503 = vmatpush1.msra.mxu0 0.0
        %504 = vmatprep.subr.mxu0 0.0
        %505 = vmatpush1.msra.mxu0 0.0
        %506 = vmatprep.subr.mxu0 0.0
        %507 = vmatpush1.msra.mxu0 0.0
        %508 = vmatprep.mubr.f32.mxu0 0.0
        %v509 = vand.u32 %v435, 4294901760
        %v510 = vsub.f32 %v435, %v509
        %v511 = vand.u32 %v510, 4294901760
        %v512 = vsub.f32 %v510, %v511
        %v513 = vand.u32 %v512, 4294901760
        %514 = vmatmul.mubr.f32.gmra.mrb[0].mxu0 %v513
        %v515 = vpop.f32.mrb[0].mxu0
        %v516 = vadd.f32 0.0, %v515
        %v517 = vpop.f32.mrb[0].mxu0
        %v518 = vadd.f32 0.0, %v517
        %519 = vdwg.mxu0
        %v520 = vand.u32 %v440, 4294901760
        %v521 = vsub.f32 %v440, %v520
        %v522 = vand.u32 %v521, 4294901760
        %v523 = vsub.f32 %v521, %v522
        %v524 = vand.u32 %v523, 4294901760
        %525 = vmatprep.subr.mxu0 %v524
        %v526 = vand.u32 %v438, 4294901760
        %v527 = vsub.f32 %v438, %v526
        %v528 = vand.u32 %v527, 4294901760
        %v529 = vsub.f32 %v527, %v528
        %v530 = vand.u32 %v529, 4294901760
        %531 = vmatpush1.msra.mxu0 %v530
        %532 = vmatprep.subr.mxu0 0.0
        %533 = vmatpush1.msra.mxu0 0.0
        %534 = vmatprep.subr.mxu0 0.0
        %535 = vmatpush1.msra.mxu0 0.0
        %536 = vmatprep.subr.mxu0 0.0
        %537 = vmatpush1.msra.mxu0 0.0
        %538 = vmatprep.subr.mxu0 0.0
        %539 = vmatpush1.msra.mxu0 0.0
        %540 = vmatprep.subr.mxu0 0.0
        %541 = vmatpush1.msra.mxu0 0.0
        %542 = vmatprep.subr.mxu0 0.0
        %543 = vmatpush1.msra.mxu0 0.0
        %544 = vmatprep.subr.mxu0 0.0
        %545 = vmatpush1.msra.mxu0 0.0
        %546 = vmatprep.subr.mxu0 0.0
        %547 = vmatpush1.msra.mxu0 0.0
        %548 = vmatprep.subr.mxu0 0.0
        %549 = vmatpush1.msra.mxu0 0.0
        %550 = vmatprep.subr.mxu0 0.0
        %551 = vmatpush1.msra.mxu0 0.0
        %552 = vmatprep.subr.mxu0 0.0
        %553 = vmatpush1.msra.mxu0 0.0
        %554 = vmatprep.subr.mxu0 0.0
        %555 = vmatpush1.msra.mxu0 0.0
        %556 = vmatprep.subr.mxu0 0.0
        %557 = vmatpush1.msra.mxu0 0.0
        %558 = vmatprep.subr.mxu0 0.0
        %559 = vmatpush1.msra.mxu0 0.0
        %560 = vmatprep.subr.mxu0 0.0
        %561 = vmatpush1.msra.mxu0 0.0
        %562 = vmatprep.subr.mxu0 0.0
        %563 = vmatpush1.msra.mxu0 0.0
        %564 = vmatprep.subr.mxu0 0.0
        %565 = vmatpush1.msra.mxu0 0.0
        %566 = vmatprep.subr.mxu0 0.0
        %567 = vmatpush1.msra.mxu0 0.0
        %568 = vmatprep.subr.mxu0 0.0
        %569 = vmatpush1.msra.mxu0 0.0
        %570 = vmatprep.subr.mxu0 0.0
        %571 = vmatpush1.msra.mxu0 0.0
        %572 = vmatprep.subr.mxu0 0.0
        %573 = vmatpush1.msra.mxu0 0.0
        %574 = vmatprep.subr.mxu0 0.0
        %575 = vmatpush1.msra.mxu0 0.0
        %576 = vmatprep.subr.mxu0 0.0
        %577 = vmatpush1.msra.mxu0 0.0
        %578 = vmatprep.subr.mxu0 0.0
        %579 = vmatpush1.msra.mxu0 0.0
        %580 = vmatprep.subr.mxu0 0.0
        %581 = vmatpush1.msra.mxu0 0.0
        %582 = vmatprep.subr.mxu0 0.0
        %583 = vmatpush1.msra.mxu0 0.0
        %584 = vmatprep.subr.mxu0 0.0
        %585 = vmatpush1.msra.mxu0 0.0
        %586 = vmatprep.subr.mxu0 0.0
        %587 = vmatpush1.msra.mxu0 0.0
        %588 = vmatprep.subr.mxu0 0.0
        %589 = vmatpush1.msra.mxu0 0.0
        %590 = vmatprep.subr.mxu0 0.0
        %591 = vmatpush1.msra.mxu0 0.0
        %592 = vmatprep.subr.mxu0 0.0
        %593 = vmatpush1.msra.mxu0 0.0
        %594 = vmatprep.mubr.f32.mxu0 0.0
        %v595 = vand.u32 %v435, 4294901760
        %596 = vmatmul.mubr.f32.gmra.mrb[0].mxu0 %v595
        %v597 = vpop.f32.mrb[0].mxu0
        %v598 = vadd.f32 %v516, %v597
        %v599 = vpop.f32.mrb[0].mxu0
        %v600 = vadd.f32 %v518, %v599
        %601 = vdwg.mxu0
        %v602 = vand.u32 %v440, 4294901760
        %v603 = vsub.f32 %v440, %v602
        %604 = vmatprep.subr.mxu0 %v603
        %v605 = vand.u32 %v438, 4294901760
        %v606 = vsub.f32 %v438, %v605
        %607 = vmatpush1.msra.mxu0 %v606
        %608 = vmatprep.subr.mxu0 0.0
        %609 = vmatpush1.msra.mxu0 0.0
        %610 = vmatprep.subr.mxu0 0.0
        %611 = vmatpush1.msra.mxu0 0.0
        %612 = vmatprep.subr.mxu0 0.0
        %613 = vmatpush1.msra.mxu0 0.0
        %614 = vmatprep.subr.mxu0 0.0
        %615 = vmatpush1.msra.mxu0 0.0
        %616 = vmatprep.subr.mxu0 0.0
        %617 = vmatpush1.msra.mxu0 0.0
        %618 = vmatprep.subr.mxu0 0.0
        %619 = vmatpush1.msra.mxu0 0.0
        %620 = vmatprep.subr.mxu0 0.0
        %621 = vmatpush1.msra.mxu0 0.0
        %622 = vmatprep.subr.mxu0 0.0
        %623 = vmatpush1.msra.mxu0 0.0
        %624 = vmatprep.subr.mxu0 0.0
        %625 = vmatpush1.msra.mxu0 0.0
        %626 = vmatprep.subr.mxu0 0.0
        %627 = vmatpush1.msra.mxu0 0.0
        %628 = vmatprep.subr.mxu0 0.0
        %629 = vmatpush1.msra.mxu0 0.0
        %630 = vmatprep.subr.mxu0 0.0
        %631 = vmatpush1.msra.mxu0 0.0
        %632 = vmatprep.subr.mxu0 0.0
        %633 = vmatpush1.msra.mxu0 0.0
        %634 = vmatprep.subr.mxu0 0.0
        %635 = vmatpush1.msra.mxu0 0.0
        %636 = vmatprep.subr.mxu0 0.0
        %637 = vmatpush1.msra.mxu0 0.0
        %638 = vmatprep.subr.mxu0 0.0
        %639 = vmatpush1.msra.mxu0 0.0
        %640 = vmatprep.subr.mxu0 0.0
        %641 = vmatpush1.msra.mxu0 0.0
        %642 = vmatprep.subr.mxu0 0.0
        %643 = vmatpush1.msra.mxu0 0.0
        %644 = vmatprep.subr.mxu0 0.0
        %645 = vmatpush1.msra.mxu0 0.0
        %646 = vmatprep.subr.mxu0 0.0
        %647 = vmatpush1.msra.mxu0 0.0
        %648 = vmatprep.subr.mxu0 0.0
        %649 = vmatpush1.msra.mxu0 0.0
        %650 = vmatprep.subr.mxu0 0.0
        %651 = vmatpush1.msra.mxu0 0.0
        %652 = vmatprep.subr.mxu0 0.0
        %653 = vmatpush1.msra.mxu0 0.0
        %654 = vmatprep.subr.mxu0 0.0
        %655 = vmatpush1.msra.mxu0 0.0
        %656 = vmatprep.subr.mxu0 0.0
        %657 = vmatpush1.msra.mxu0 0.0
        %658 = vmatprep.subr.mxu0 0.0
        %659 = vmatpush1.msra.mxu0 0.0
        %660 = vmatprep.subr.mxu0 0.0
        %661 = vmatpush1.msra.mxu0 0.0
        %662 = vmatprep.subr.mxu0 0.0
        %663 = vmatpush1.msra.mxu0 0.0
        %664 = vmatprep.subr.mxu0 0.0
        %665 = vmatpush1.msra.mxu0 0.0
        %666 = vmatprep.subr.mxu0 0.0
        %667 = vmatpush1.msra.mxu0 0.0
        %668 = vmatprep.subr.mxu0 0.0
        %669 = vmatpush1.msra.mxu0 0.0
        %670 = vmatprep.mubr.f32.mxu0 0.0
        %v671 = vand.u32 %v435, 4294901760
        %v672 = vsub.f32 %v435, %v671
        %673 = vmatmul.mubr.f32.gmra.mrb[0].mxu0 %v672
        %v674 = vpop.f32.mrb[0].mxu0
        %v675 = vadd.f32 %v598, %v674
        %v676 = vpop.f32.mrb[0].mxu0
        %v677 = vadd.f32 %v600, %v676
        %678 = vdwg.mxu0
        %v679 = vand.u32 %v440, 4294901760
        %680 = vmatprep.subr.mxu0 %v679
        %v681 = vand.u32 %v438, 4294901760
        %682 = vmatpush1.msra.mxu0 %v681
        %683 = vmatprep.subr.mxu0 0.0
        %684 = vmatpush1.msra.mxu0 0.0
        %685 = vmatprep.subr.mxu0 0.0
        %686 = vmatpush1.msra.mxu0 0.0
        %687 = vmatprep.subr.mxu0 0.0
        %688 = vmatpush1.msra.mxu0 0.0
        %689 = vmatprep.subr.mxu0 0.0
        %690 = vmatpush1.msra.mxu0 0.0
        %691 = vmatprep.subr.mxu0 0.0
        %692 = vmatpush1.msra.mxu0 0.0
        %693 = vmatprep.subr.mxu0 0.0
        %694 = vmatpush1.msra.mxu0 0.0
        %695 = vmatprep.subr.mxu0 0.0
        %696 = vmatpush1.msra.mxu0 0.0
        %697 = vmatprep.subr.mxu0 0.0
        %698 = vmatpush1.msra.mxu0 0.0
        %699 = vmatprep.subr.mxu0 0.0
        %700 = vmatpush1.msra.mxu0 0.0
        %701 = vmatprep.subr.mxu0 0.0
        %702 = vmatpush1.msra.mxu0 0.0
        %703 = vmatprep.subr.mxu0 0.0
        %704 = vmatpush1.msra.mxu0 0.0
        %705 = vmatprep.subr.mxu0 0.0
        %706 = vmatpush1.msra.mxu0 0.0
        %707 = vmatprep.subr.mxu0 0.0
        %708 = vmatpush1.msra.mxu0 0.0
        %709 = vmatprep.subr.mxu0 0.0
        %710 = vmatpush1.msra.mxu0 0.0
        %711 = vmatprep.subr.mxu0 0.0
        %712 = vmatpush1.msra.mxu0 0.0
        %713 = vmatprep.subr.mxu0 0.0
        %714 = vmatpush1.msra.mxu0 0.0
        %715 = vmatprep.subr.mxu0 0.0
        %716 = vmatpush1.msra.mxu0 0.0
        %717 = vmatprep.subr.mxu0 0.0
        %718 = vmatpush1.msra.mxu0 0.0
        %719 = vmatprep.subr.mxu0 0.0
        %720 = vmatpush1.msra.mxu0 0.0
        %721 = vmatprep.subr.mxu0 0.0
        %722 = vmatpush1.msra.mxu0 0.0
        %723 = vmatprep.subr.mxu0 0.0
        %724 = vmatpush1.msra.mxu0 0.0
        %725 = vmatprep.subr.mxu0 0.0
        %726 = vmatpush1.msra.mxu0 0.0
        %727 = vmatprep.subr.mxu0 0.0
        %728 = vmatpush1.msra.mxu0 0.0
        %729 = vmatprep.subr.mxu0 0.0
        %730 = vmatpush1.msra.mxu0 0.0
        %731 = vmatprep.subr.mxu0 0.0
        %732 = vmatpush1.msra.mxu0 0.0
        %733 = vmatprep.subr.mxu0 0.0
        %734 = vmatpush1.msra.mxu0 0.0
        %735 = vmatprep.subr.mxu0 0.0
        %736 = vmatpush1.msra.mxu0 0.0
        %737 = vmatprep.subr.mxu0 0.0
        %738 = vmatpush1.msra.mxu0 0.0
        %739 = vmatprep.subr.mxu0 0.0
        %740 = vmatpush1.msra.mxu0 0.0
        %741 = vmatprep.subr.mxu0 0.0
        %742 = vmatpush1.msra.mxu0 0.0
        %743 = vmatprep.subr.mxu0 0.0
        %744 = vmatpush1.msra.mxu0 0.0
        %745 = vmatprep.mubr.f32.mxu0 0.0
        %v746 = vand.u32 %v435, 4294901760
        %v747 = vsub.f32 %v435, %v746
        %v748 = vand.u32 %v747, 4294901760
        %749 = vmatmul.mubr.f32.gmra.mrb[0].mxu0 %v748
        %v750 = vpop.f32.mrb[0].mxu0
        %v751 = vadd.f32 %v675, %v750
        %v752 = vpop.f32.mrb[0].mxu0
        %v753 = vadd.f32 %v677, %v752
        %754 = vdwg.mxu0
        %v755 = vand.u32 %v440, 4294901760
        %v756 = vsub.f32 %v440, %v755
        %v757 = vand.u32 %v756, 4294901760
        %758 = vmatprep.subr.mxu0 %v757
        %v759 = vand.u32 %v438, 4294901760
        %v760 = vsub.f32 %v438, %v759
        %v761 = vand.u32 %v760, 4294901760
        %762 = vmatpush1.msra.mxu0 %v761
        %763 = vmatprep.subr.mxu0 0.0
        %764 = vmatpush1.msra.mxu0 0.0
        %765 = vmatprep.subr.mxu0 0.0
        %766 = vmatpush1.msra.mxu0 0.0
        %767 = vmatprep.subr.mxu0 0.0
        %768 = vmatpush1.msra.mxu0 0.0
        %769 = vmatprep.subr.mxu0 0.0
        %770 = vmatpush1.msra.mxu0 0.0
        %771 = vmatprep.subr.mxu0 0.0
        %772 = vmatpush1.msra.mxu0 0.0
        %773 = vmatprep.subr.mxu0 0.0
        %774 = vmatpush1.msra.mxu0 0.0
        %775 = vmatprep.subr.mxu0 0.0
        %776 = vmatpush1.msra.mxu0 0.0
        %777 = vmatprep.subr.mxu0 0.0
        %778 = vmatpush1.msra.mxu0 0.0
        %779 = vmatprep.subr.mxu0 0.0
        %780 = vmatpush1.msra.mxu0 0.0
        %781 = vmatprep.subr.mxu0 0.0
        %782 = vmatpush1.msra.mxu0 0.0
        %783 = vmatprep.subr.mxu0 0.0
        %784 = vmatpush1.msra.mxu0 0.0
        %785 = vmatprep.subr.mxu0 0.0
        %786 = vmatpush1.msra.mxu0 0.0
        %787 = vmatprep.subr.mxu0 0.0
        %788 = vmatpush1.msra.mxu0 0.0
        %789 = vmatprep.subr.mxu0 0.0
        %790 = vmatpush1.msra.mxu0 0.0
        %791 = vmatprep.subr.mxu0 0.0
        %792 = vmatpush1.msra.mxu0 0.0
        %793 = vmatprep.subr.mxu0 0.0
        %794 = vmatpush1.msra.mxu0 0.0
        %795 = vmatprep.subr.mxu0 0.0
        %796 = vmatpush1.msra.mxu0 0.0
        %797 = vmatprep.subr.mxu0 0.0
        %798 = vmatpush1.msra.mxu0 0.0
        %799 = vmatprep.subr.mxu0 0.0
        %800 = vmatpush1.msra.mxu0 0.0
        %801 = vmatprep.subr.mxu0 0.0
        %802 = vmatpush1.msra.mxu0 0.0
        %803 = vmatprep.subr.mxu0 0.0
        %804 = vmatpush1.msra.mxu0 0.0
        %805 = vmatprep.subr.mxu0 0.0
        %806 = vmatpush1.msra.mxu0 0.0
        %807 = vmatprep.subr.mxu0 0.0
        %808 = vmatpush1.msra.mxu0 0.0
        %809 = vmatprep.subr.mxu0 0.0
        %810 = vmatpush1.msra.mxu0 0.0
        %811 = vmatprep.subr.mxu0 0.0
        %812 = vmatpush1.msra.mxu0 0.0
        %813 = vmatprep.subr.mxu0 0.0
        %814 = vmatpush1.msra.mxu0 0.0
        %815 = vmatprep.subr.mxu0 0.0
        %816 = vmatpush1.msra.mxu0 0.0
        %817 = vmatprep.subr.mxu0 0.0
        %818 = vmatpush1.msra.mxu0 0.0
        %819 = vmatprep.subr.mxu0 0.0
        %820 = vmatpush1.msra.mxu0 0.0
        %821 = vmatprep.subr.mxu0 0.0
        %822 = vmatpush1.msra.mxu0 0.0
        %823 = vmatprep.subr.mxu0 0.0
        %824 = vmatpush1.msra.mxu0 0.0
        %825 = vmatprep.mubr.f32.mxu0 0.0
        %v826 = vand.u32 %v435, 4294901760
        %827 = vmatmul.mubr.f32.gmra.mrb[0].mxu0 %v826
        %v828 = vpop.f32.mrb[0].mxu0
        %v829 = vadd.f32 %v751, %v828
        %v830 = vpop.f32.mrb[0].mxu0
        %v831 = vadd.f32 %v753, %v830
        %832 = vdwg.mxu0
        %v833 = vand.u32 %v440, 4294901760
        %834 = vmatprep.subr.mxu0 %v833
        %v835 = vand.u32 %v438, 4294901760
        %836 = vmatpush1.msra.mxu0 %v835
        %837 = vmatprep.subr.mxu0 0.0
        %838 = vmatpush1.msra.mxu0 0.0
        %839 = vmatprep.subr.mxu0 0.0
        %840 = vmatpush1.msra.mxu0 0.0
        %841 = vmatprep.subr.mxu0 0.0
        %842 = vmatpush1.msra.mxu0 0.0
        %843 = vmatprep.subr.mxu0 0.0
        %844 = vmatpush1.msra.mxu0 0.0
        %845 = vmatprep.subr.mxu0 0.0
        %846 = vmatpush1.msra.mxu0 0.0
        %847 = vmatprep.subr.mxu0 0.0
        %848 = vmatpush1.msra.mxu0 0.0
        %849 = vmatprep.subr.mxu0 0.0
        %850 = vmatpush1.msra.mxu0 0.0
        %851 = vmatprep.subr.mxu0 0.0
        %852 = vmatpush1.msra.mxu0 0.0
        %853 = vmatprep.subr.mxu0 0.0
        %854 = vmatpush1.msra.mxu0 0.0
        %855 = vmatprep.subr.mxu0 0.0
        %856 = vmatpush1.msra.mxu0 0.0
        %857 = vmatprep.subr.mxu0 0.0
        %858 = vmatpush1.msra.mxu0 0.0
        %859 = vmatprep.subr.mxu0 0.0
        %860 = vmatpush1.msra.mxu0 0.0
        %861 = vmatprep.subr.mxu0 0.0
        %862 = vmatpush1.msra.mxu0 0.0
        %863 = vmatprep.subr.mxu0 0.0
        %864 = vmatpush1.msra.mxu0 0.0
        %865 = vmatprep.subr.mxu0 0.0
        %866 = vmatpush1.msra.mxu0 0.0
        %867 = vmatprep.subr.mxu0 0.0
        %868 = vmatpush1.msra.mxu0 0.0
        %869 = vmatprep.subr.mxu0 0.0
        %870 = vmatpush1.msra.mxu0 0.0
        %871 = vmatprep.subr.mxu0 0.0
        %872 = vmatpush1.msra.mxu0 0.0
        %873 = vmatprep.subr.mxu0 0.0
        %874 = vmatpush1.msra.mxu0 0.0
        %875 = vmatprep.subr.mxu0 0.0
        %876 = vmatpush1.msra.mxu0 0.0
        %877 = vmatprep.subr.mxu0 0.0
        %878 = vmatpush1.msra.mxu0 0.0
        %879 = vmatprep.subr.mxu0 0.0
        %880 = vmatpush1.msra.mxu0 0.0
        %881 = vmatprep.subr.mxu0 0.0
        %882 = vmatpush1.msra.mxu0 0.0
        %883 = vmatprep.subr.mxu0 0.0
        %884 = vmatpush1.msra.mxu0 0.0
        %885 = vmatprep.subr.mxu0 0.0
        %886 = vmatpush1.msra.mxu0 0.0
        %887 = vmatprep.subr.mxu0 0.0
        %888 = vmatpush1.msra.mxu0 0.0
        %889 = vmatprep.subr.mxu0 0.0
        %890 = vmatpush1.msra.mxu0 0.0
        %891 = vmatprep.subr.mxu0 0.0
        %892 = vmatpush1.msra.mxu0 0.0
        %893 = vmatprep.subr.mxu0 0.0
        %894 = vmatpush1.msra.mxu0 0.0
        %895 = vmatprep.subr.mxu0 0.0
        %896 = vmatpush1.msra.mxu0 0.0
        %897 = vmatprep.subr.mxu0 0.0
        %898 = vmatpush1.msra.mxu0 0.0
        %899 = vmatprep.mubr.f32.mxu0 0.0
        %v900 = vand.u32 %v435, 4294901760
        %901 = vmatmul.mubr.f32.gmra.mrb[0].mxu0 %v900
        %v902 = vpop.f32.mrb[0].mxu0
        %v903 = vadd.f32 %v829, %v902
        %v904 = vpop.f32.mrb[0].mxu0
        %v905 = vadd.f32 %v831, %v904
        %906 = vdwg.mxu0
        %v908 = vsel %vm433, %v420, 0
        %v911 = vsel %vm437, %v432, 0
        %v913 = vsel %vm437, %v430, 0
        %v915 = vand.u32 %v913, 4294901760
        %916 = vmatprep.subr.mxu0 %v915
        %v917 = vand.u32 %v911, 4294901760
        %918 = vmatpush1.msra.mxu0 %v917
        %919 = vmatprep.subr.mxu0 0.0
        %920 = vmatpush1.msra.mxu0 0.0
        %921 = vmatprep.subr.mxu0 0.0
        %922 = vmatpush1.msra.mxu0 0.0
        %923 = vmatprep.subr.mxu0 0.0
        %924 = vmatpush1.msra.mxu0 0.0
        %925 = vmatprep.subr.mxu0 0.0
        %926 = vmatpush1.msra.mxu0 0.0
        %927 = vmatprep.subr.mxu0 0.0
        %928 = vmatpush1.msra.mxu0 0.0
        %929 = vmatprep.subr.mxu0 0.0
        %930 = vmatpush1.msra.mxu0 0.0
        %931 = vmatprep.subr.mxu0 0.0
        %932 = vmatpush1.msra.mxu0 0.0
        %933 = vmatprep.subr.mxu0 0.0
        %934 = vmatpush1.msra.mxu0 0.0
        %935 = vmatprep.subr.mxu0 0.0
        %936 = vmatpush1.msra.mxu0 0.0
        %937 = vmatprep.subr.mxu0 0.0
        %938 = vmatpush1.msra.mxu0 0.0
        %939 = vmatprep.subr.mxu0 0.0
        %940 = vmatpush1.msra.mxu0 0.0
        %941 = vmatprep.subr.mxu0 0.0
        %942 = vmatpush1.msra.mxu0 0.0
        %943 = vmatprep.subr.mxu0 0.0
        %944 = vmatpush1.msra.mxu0 0.0
        %945 = vmatprep.subr.mxu0 0.0
        %946 = vmatpush1.msra.mxu0 0.0
        %947 = vmatprep.subr.mxu0 0.0
        %948 = vmatpush1.msra.mxu0 0.0
        %949 = vmatprep.subr.mxu0 0.0
        %950 = vmatpush1.msra.mxu0 0.0
        %951 = vmatprep.subr.mxu0 0.0
        %952 = vmatpush1.msra.mxu0 0.0
        %953 = vmatprep.subr.mxu0 0.0
        %954 = vmatpush1.msra.mxu0 0.0
        %955 = vmatprep.subr.mxu0 0.0
        %956 = vmatpush1.msra.mxu0 0.0
        %957 = vmatprep.subr.mxu0 0.0
        %958 = vmatpush1.msra.mxu0 0.0
        %959 = vmatprep.subr.mxu0 0.0
        %960 = vmatpush1.msra.mxu0 0.0
        %961 = vmatprep.subr.mxu0 0.0
        %962 = vmatpush1.msra.mxu0 0.0
        %963 = vmatprep.subr.mxu0 0.0
        %964 = vmatpush1.msra.mxu0 0.0
        %965 = vmatprep.subr.mxu0 0.0
        %966 = vmatpush1.msra.mxu0 0.0
        %967 = vmatprep.subr.mxu0 0.0
        %968 = vmatpush1.msra.mxu0 0.0
        %969 = vmatprep.subr.mxu0 0.0
        %970 = vmatpush1.msra.mxu0 0.0
        %971 = vmatprep.subr.mxu0 0.0
        %972 = vmatpush1.msra.mxu0 0.0
        %973 = vmatprep.subr.mxu0 0.0
        %974 = vmatpush1.msra.mxu0 0.0
        %975 = vmatprep.subr.mxu0 0.0
        %976 = vmatpush1.msra.mxu0 0.0
        %977 = vmatprep.subr.mxu0 0.0
        %978 = vmatpush1.msra.mxu0 0.0
        %979 = vmatprep.subr.mxu0 0.0
        %980 = vmatpush1.msra.mxu0 0.0
        %981 = vmatprep.mubr.f32.mxu0 0.0
        %v982 = vand.u32 %v908, 4294901760
        %v983 = vsub.f32 %v908, %v982
        %v984 = vand.u32 %v983, 4294901760
        %v985 = vsub.f32 %v983, %v984
        %v986 = vand.u32 %v985, 4294901760
        %987 = vmatmul.mubr.f32.gmra.mrb[0].mxu0 %v986
        %v988 = vpop.f32.mrb[0].mxu0
        %v989 = vadd.f32 %v903, %v988
        %v990 = vpop.f32.mrb[0].mxu0
        %v991 = vadd.f32 %v905, %v990
        %992 = vdwg.mxu0
        %v993 = vand.u32 %v913, 4294901760
        %v994 = vsub.f32 %v913, %v993
        %v995 = vand.u32 %v994, 4294901760
        %v996 = vsub.f32 %v994, %v995
        %v997 = vand.u32 %v996, 4294901760
        %998 = vmatprep.subr.mxu0 %v997
        %v999 = vand.u32 %v911, 4294901760
        %v1000 = vsub.f32 %v911, %v999
        %v1001 = vand.u32 %v1000, 4294901760
        %v1002 = vsub.f32 %v1000, %v1001
        %v1003 = vand.u32 %v1002, 4294901760
        %1004 = vmatpush1.msra.mxu0 %v1003
        %1005 = vmatprep.subr.mxu0 0.0
        %1006 = vmatpush1.msra.mxu0 0.0
        %1007 = vmatprep.subr.mxu0 0.0
        %1008 = vmatpush1.msra.mxu0 0.0
        %1009 = vmatprep.subr.mxu0 0.0
        %1010 = vmatpush1.msra.mxu0 0.0
        %1011 = vmatprep.subr.mxu0 0.0
        %1012 = vmatpush1.msra.mxu0 0.0
        %1013 = vmatprep.subr.mxu0 0.0
        %1014 = vmatpush1.msra.mxu0 0.0
        %1015 = vmatprep.subr.mxu0 0.0
        %1016 = vmatpush1.msra.mxu0 0.0
        %1017 = vmatprep.subr.mxu0 0.0
        %1018 = vmatpush1.msra.mxu0 0.0
        %1019 = vmatprep.subr.mxu0 0.0
        %1020 = vmatpush1.msra.mxu0 0.0
        %1021 = vmatprep.subr.mxu0 0.0
        %1022 = vmatpush1.msra.mxu0 0.0
        %1023 = vmatprep.subr.mxu0 0.0
        %1024 = vmatpush1.msra.mxu0 0.0
        %1025 = vmatprep.subr.mxu0 0.0
        %1026 = vmatpush1.msra.mxu0 0.0
        %1027 = vmatprep.subr.mxu0 0.0
        %1028 = vmatpush1.msra.mxu0 0.0
        %1029 = vmatprep.subr.mxu0 0.0
        %1030 = vmatpush1.msra.mxu0 0.0
        %1031 = vmatprep.subr.mxu0 0.0
        %1032 = vmatpush1.msra.mxu0 0.0
        %1033 = vmatprep.subr.mxu0 0.0
        %1034 = vmatpush1.msra.mxu0 0.0
        %1035 = vmatprep.subr.mxu0 0.0
        %1036 = vmatpush1.msra.mxu0 0.0
        %1037 = vmatprep.subr.mxu0 0.0
        %1038 = vmatpush1.msra.mxu0 0.0
        %1039 = vmatprep.subr.mxu0 0.0
        %1040 = vmatpush1.msra.mxu0 0.0
        %1041 = vmatprep.subr.mxu0 0.0
        %1042 = vmatpush1.msra.mxu0 0.0
        %1043 = vmatprep.subr.mxu0 0.0
        %1044 = vmatpush1.msra.mxu0 0.0
        %1045 = vmatprep.subr.mxu0 0.0
        %1046 = vmatpush1.msra.mxu0 0.0
        %1047 = vmatprep.subr.mxu0 0.0
        %1048 = vmatpush1.msra.mxu0 0.0
        %1049 = vmatprep.subr.mxu0 0.0
        %1050 = vmatpush1.msra.mxu0 0.0
        %1051 = vmatprep.subr.mxu0 0.0
        %1052 = vmatpush1.msra.mxu0 0.0
        %1053 = vmatprep.subr.mxu0 0.0
        %1054 = vmatpush1.msra.mxu0 0.0
        %1055 = vmatprep.subr.mxu0 0.0
        %1056 = vmatpush1.msra.mxu0 0.0
        %1057 = vmatprep.subr.mxu0 0.0
        %1058 = vmatpush1.msra.mxu0 0.0
        %1059 = vmatprep.subr.mxu0 0.0
        %1060 = vmatpush1.msra.mxu0 0.0
        %1061 = vmatprep.subr.mxu0 0.0
        %1062 = vmatpush1.msra.mxu0 0.0
        %1063 = vmatprep.subr.mxu0 0.0
        %1064 = vmatpush1.msra.mxu0 0.0
        %1065 = vmatprep.subr.mxu0 0.0
        %1066 = vmatpush1.msra.mxu0 0.0
        %1067 = vmatprep.mubr.f32.mxu0 0.0
        %v1068 = vand.u32 %v908, 4294901760
        %1069 = vmatmul.mubr.f32.gmra.mrb[0].mxu0 %v1068
        %v1070 = vpop.f32.mrb[0].mxu0
        %v1071 = vadd.f32 %v989, %v1070
        %v1072 = vpop.f32.mrb[0].mxu0
        %v1073 = vadd.f32 %v991, %v1072
        %1074 = vdwg.mxu0
        %v1075 = vand.u32 %v913, 4294901760
        %v1076 = vsub.f32 %v913, %v1075
        %1077 = vmatprep.subr.mxu0 %v1076
        %v1078 = vand.u32 %v911, 4294901760
        %v1079 = vsub.f32 %v911, %v1078
        %1080 = vmatpush1.msra.mxu0 %v1079
        %1081 = vmatprep.subr.mxu0 0.0
        %1082 = vmatpush1.msra.mxu0 0.0
        %1083 = vmatprep.subr.mxu0 0.0
        %1084 = vmatpush1.msra.mxu0 0.0
        %1085 = vmatprep.subr.mxu0 0.0
        %1086 = vmatpush1.msra.mxu0 0.0
        %1087 = vmatprep.subr.mxu0 0.0
        %1088 = vmatpush1.msra.mxu0 0.0
        %1089 = vmatprep.subr.mxu0 0.0
        %1090 = vmatpush1.msra.mxu0 0.0
        %1091 = vmatprep.subr.mxu0 0.0
        %1092 = vmatpush1.msra.mxu0 0.0
        %1093 = vmatprep.subr.mxu0 0.0
        %1094 = vmatpush1.msra.mxu0 0.0
        %1095 = vmatprep.subr.mxu0 0.0
        %1096 = vmatpush1.msra.mxu0 0.0
        %1097 = vmatprep.subr.mxu0 0.0
        %1098 = vmatpush1.msra.mxu0 0.0
        %1099 = vmatprep.subr.mxu0 0.0
        %1100 = vmatpush1.msra.mxu0 0.0
        %1101 = vmatprep.subr.mxu0 0.0
        %1102 = vmatpush1.msra.mxu0 0.0
        %1103 = vmatprep.subr.mxu0 0.0
        %1104 = vmatpush1.msra.mxu0 0.0
        %1105 = vmatprep.subr.mxu0 0.0
        %1106 = vmatpush1.msra.mxu0 0.0
        %1107 = vmatprep.subr.mxu0 0.0
        %1108 = vmatpush1.msra.mxu0 0.0
        %1109 = vmatprep.subr.mxu0 0.0
        %1110 = vmatpush1.msra.mxu0 0.0
        %1111 = vmatprep.subr.mxu0 0.0
        %1112 = vmatpush1.msra.mxu0 0.0
        %1113 = vmatprep.subr.mxu0 0.0
        %1114 = vmatpush1.msra.mxu0 0.0
        %1115 = vmatprep.subr.mxu0 0.0
        %1116 = vmatpush1.msra.mxu0 0.0
        %1117 = vmatprep.subr.mxu0 0.0
        %1118 = vmatpush1.msra.mxu0 0.0
        %1119 = vmatprep.subr.mxu0 0.0
        %1120 = vmatpush1.msra.mxu0 0.0
        %1121 = vmatprep.subr.mxu0 0.0
        %1122 = vmatpush1.msra.mxu0 0.0
        %1123 = vmatprep.subr.mxu0 0.0
        %1124 = vmatpush1.msra.mxu0 0.0
        %1125 = vmatprep.subr.mxu0 0.0
        %1126 = vmatpush1.msra.mxu0 0.0
        %1127 = vmatprep.subr.mxu0 0.0
        %1128 = vmatpush1.msra.mxu0 0.0
        %1129 = vmatprep.subr.mxu0 0.0
        %1130 = vmatpush1.msra.mxu0 0.0
        %1131 = vmatprep.subr.mxu0 0.0
        %1132 = vmatpush1.msra.mxu0 0.0
        %1133 = vmatprep.subr.mxu0 0.0
        %1134 = vmatpush1.msra.mxu0 0.0
        %1135 = vmatprep.subr.mxu0 0.0
        %1136 = vmatpush1.msra.mxu0 0.0
        %1137 = vmatprep.subr.mxu0 0.0
        %1138 = vmatpush1.msra.mxu0 0.0
        %1139 = vmatprep.subr.mxu0 0.0
        %1140 = vmatpush1.msra.mxu0 0.0
        %1141 = vmatprep.subr.mxu0 0.0
        %1142 = vmatpush1.msra.mxu0 0.0
        %1143 = vmatprep.mubr.f32.mxu0 0.0
        %v1144 = vand.u32 %v908, 4294901760
        %v1145 = vsub.f32 %v908, %v1144
        %1146 = vmatmul.mubr.f32.gmra.mrb[0].mxu0 %v1145
        %v1147 = vpop.f32.mrb[0].mxu0
        %v1148 = vadd.f32 %v1071, %v1147
        %v1149 = vpop.f32.mrb[0].mxu0
        %v1150 = vadd.f32 %v1073, %v1149
        %1151 = vdwg.mxu0
        %v1152 = vand.u32 %v913, 4294901760
        %1153 = vmatprep.subr.mxu0 %v1152
        %v1154 = vand.u32 %v911, 4294901760
        %1155 = vmatpush1.msra.mxu0 %v1154
        %1156 = vmatprep.subr.mxu0 0.0
        %1157 = vmatpush1.msra.mxu0 0.0
        %1158 = vmatprep.subr.mxu0 0.0
        %1159 = vmatpush1.msra.mxu0 0.0
        %1160 = vmatprep.subr.mxu0 0.0
        %1161 = vmatpush1.msra.mxu0 0.0
        %1162 = vmatprep.subr.mxu0 0.0
        %1163 = vmatpush1.msra.mxu0 0.0
        %1164 = vmatprep.subr.mxu0 0.0
        %1165 = vmatpush1.msra.mxu0 0.0
        %1166 = vmatprep.subr.mxu0 0.0
        %1167 = vmatpush1.msra.mxu0 0.0
        %1168 = vmatprep.subr.mxu0 0.0
        %1169 = vmatpush1.msra.mxu0 0.0
        %1170 = vmatprep.subr.mxu0 0.0
        %1171 = vmatpush1.msra.mxu0 0.0
        %1172 = vmatprep.subr.mxu0 0.0
        %1173 = vmatpush1.msra.mxu0 0.0
        %1174 = vmatprep.subr.mxu0 0.0
        %1175 = vmatpush1.msra.mxu0 0.0
        %1176 = vmatprep.subr.mxu0 0.0
        %1177 = vmatpush1.msra.mxu0 0.0
        %1178 = vmatprep.subr.mxu0 0.0
        %1179 = vmatpush1.msra.mxu0 0.0
        %1180 = vmatprep.subr.mxu0 0.0
        %1181 = vmatpush1.msra.mxu0 0.0
        %1182 = vmatprep.subr.mxu0 0.0
        %1183 = vmatpush1.msra.mxu0 0.0
        %1184 = vmatprep.subr.mxu0 0.0
        %1185 = vmatpush1.msra.mxu0 0.0
        %1186 = vmatprep.subr.mxu0 0.0
        %1187 = vmatpush1.msra.mxu0 0.0
        %1188 = vmatprep.subr.mxu0 0.0
        %1189 = vmatpush1.msra.mxu0 0.0
        %1190 = vmatprep.subr.mxu0 0.0
        %1191 = vmatpush1.msra.mxu0 0.0
        %1192 = vmatprep.subr.mxu0 0.0
        %1193 = vmatpush1.msra.mxu0 0.0
        %1194 = vmatprep.subr.mxu0 0.0
        %1195 = vmatpush1.msra.mxu0 0.0
        %1196 = vmatprep.subr.mxu0 0.0
        %1197 = vmatpush1.msra.mxu0 0.0
        %1198 = vmatprep.subr.mxu0 0.0
        %1199 = vmatpush1.msra.mxu0 0.0
        %1200 = vmatprep.subr.mxu0 0.0
        %1201 = vmatpush1.msra.mxu0 0.0
        %1202 = vmatprep.subr.mxu0 0.0
        %1203 = vmatpush1.msra.mxu0 0.0
        %1204 = vmatprep.subr.mxu0 0.0
        %1205 = vmatpush1.msra.mxu0 0.0
        %1206 = vmatprep.subr.mxu0 0.0
        %1207 = vmatpush1.msra.mxu0 0.0
        %1208 = vmatprep.subr.mxu0 0.0
        %1209 = vmatpush1.msra.mxu0 0.0
        %1210 = vmatprep.subr.mxu0 0.0
        %1211 = vmatpush1.msra.mxu0 0.0
        %1212 = vmatprep.subr.mxu0 0.0
        %1213 = vmatpush1.msra.mxu0 0.0
        %1214 = vmatprep.subr.mxu0 0.0
        %1215 = vmatpush1.msra.mxu0 0.0
        %1216 = vmatprep.subr.mxu0 0.0
        %1217 = vmatpush1.msra.mxu0 0.0
        %1218 = vmatprep.mubr.f32.mxu0 0.0
        %v1219 = vand.u32 %v908, 4294901760
        %v1220 = vsub.f32 %v908, %v1219
        %v1221 = vand.u32 %v1220, 4294901760
        %1222 = vmatmul.mubr.f32.gmra.mrb[0].mxu0 %v1221
        %v1223 = vpop.f32.mrb[0].mxu0
        %v1224 = vadd.f32 %v1148, %v1223
        %v1225 = vpop.f32.mrb[0].mxu0
        %v1226 = vadd.f32 %v1150, %v1225
        %1227 = vdwg.mxu0
        %v1228 = vand.u32 %v913, 4294901760
        %v1229 = vsub.f32 %v913, %v1228
        %v1230 = vand.u32 %v1229, 4294901760
        %1231 = vmatprep.subr.mxu0 %v1230
        %v1232 = vand.u32 %v911, 4294901760
        %v1233 = vsub.f32 %v911, %v1232
        %v1234 = vand.u32 %v1233, 4294901760
        %1235 = vmatpush1.msra.mxu0 %v1234
        %1236 = vmatprep.subr.mxu0 0.0
        %1237 = vmatpush1.msra.mxu0 0.0
        %1238 = vmatprep.subr.mxu0 0.0
        %1239 = vmatpush1.msra.mxu0 0.0
        %1240 = vmatprep.subr.mxu0 0.0
        %1241 = vmatpush1.msra.mxu0 0.0
        %1242 = vmatprep.subr.mxu0 0.0
        %1243 = vmatpush1.msra.mxu0 0.0
        %1244 = vmatprep.subr.mxu0 0.0
        %1245 = vmatpush1.msra.mxu0 0.0
        %1246 = vmatprep.subr.mxu0 0.0
        %1247 = vmatpush1.msra.mxu0 0.0
        %1248 = vmatprep.subr.mxu0 0.0
        %1249 = vmatpush1.msra.mxu0 0.0
        %1250 = vmatprep.subr.mxu0 0.0
        %1251 = vmatpush1.msra.mxu0 0.0
        %1252 = vmatprep.subr.mxu0 0.0
        %1253 = vmatpush1.msra.mxu0 0.0
        %1254 = vmatprep.subr.mxu0 0.0
        %1255 = vmatpush1.msra.mxu0 0.0
        %1256 = vmatprep.subr.mxu0 0.0
        %1257 = vmatpush1.msra.mxu0 0.0
        %1258 = vmatprep.subr.mxu0 0.0
        %1259 = vmatpush1.msra.mxu0 0.0
        %1260 = vmatprep.subr.mxu0 0.0
        %1261 = vmatpush1.msra.mxu0 0.0
        %1262 = vmatprep.subr.mxu0 0.0
        %1263 = vmatpush1.msra.mxu0 0.0
        %1264 = vmatprep.subr.mxu0 0.0
        %1265 = vmatpush1.msra.mxu0 0.0
        %1266 = vmatprep.subr.mxu0 0.0
        %1267 = vmatpush1.msra.mxu0 0.0
        %1268 = vmatprep.subr.mxu0 0.0
        %1269 = vmatpush1.msra.mxu0 0.0
        %1270 = vmatprep.subr.mxu0 0.0
        %1271 = vmatpush1.msra.mxu0 0.0
        %1272 = vmatprep.subr.mxu0 0.0
        %1273 = vmatpush1.msra.mxu0 0.0
        %1274 = vmatprep.subr.mxu0 0.0
        %1275 = vmatpush1.msra.mxu0 0.0
        %1276 = vmatprep.subr.mxu0 0.0
        %1277 = vmatpush1.msra.mxu0 0.0
        %1278 = vmatprep.subr.mxu0 0.0
        %1279 = vmatpush1.msra.mxu0 0.0
        %1280 = vmatprep.subr.mxu0 0.0
        %1281 = vmatpush1.msra.mxu0 0.0
        %1282 = vmatprep.subr.mxu0 0.0
        %1283 = vmatpush1.msra.mxu0 0.0
        %1284 = vmatprep.subr.mxu0 0.0
        %1285 = vmatpush1.msra.mxu0 0.0
        %1286 = vmatprep.subr.mxu0 0.0
        %1287 = vmatpush1.msra.mxu0 0.0
        %1288 = vmatprep.subr.mxu0 0.0
        %1289 = vmatpush1.msra.mxu0 0.0
        %1290 = vmatprep.subr.mxu0 0.0
        %1291 = vmatpush1.msra.mxu0 0.0
        %1292 = vmatprep.subr.mxu0 0.0
        %1293 = vmatpush1.msra.mxu0 0.0
        %1294 = vmatprep.subr.mxu0 0.0
        %1295 = vmatpush1.msra.mxu0 0.0
        %1296 = vmatprep.subr.mxu0 0.0
        %1297 = vmatpush1.msra.mxu0 0.0
        %1298 = vmatprep.mubr.f32.mxu0 0.0
        %v1299 = vand.u32 %v908, 4294901760
        %1300 = vmatmul.mubr.f32.gmra.mrb[0].mxu0 %v1299
        %v1301 = vpop.f32.mrb[0].mxu0
        %v1302 = vadd.f32 %v1224, %v1301
        %v1303 = vpop.f32.mrb[0].mxu0
        %v1304 = vadd.f32 %v1226, %v1303
        %1305 = vdwg.mxu0
        %v1306 = vand.u32 %v913, 4294901760
        %1307 = vmatprep.subr.mxu0 %v1306
        %v1308 = vand.u32 %v911, 4294901760
        %1309 = vmatpush1.msra.mxu0 %v1308
        %1310 = vmatprep.subr.mxu0 0.0
        %1311 = vmatpush1.msra.mxu0 0.0
        %1312 = vmatprep.subr.mxu0 0.0
        %1313 = vmatpush1.msra.mxu0 0.0
        %1314 = vmatprep.subr.mxu0 0.0
        %1315 = vmatpush1.msra.mxu0 0.0
        %1316 = vmatprep.subr.mxu0 0.0
        %1317 = vmatpush1.msra.mxu0 0.0
        %1318 = vmatprep.subr.mxu0 0.0
        %1319 = vmatpush1.msra.mxu0 0.0
        %1320 = vmatprep.subr.mxu0 0.0
        %1321 = vmatpush1.msra.mxu0 0.0
        %1322 = vmatprep.subr.mxu0 0.0
        %1323 = vmatpush1.msra.mxu0 0.0
        %1324 = vmatprep.subr.mxu0 0.0
        %1325 = vmatpush1.msra.mxu0 0.0
        %1326 = vmatprep.subr.mxu0 0.0
        %1327 = vmatpush1.msra.mxu0 0.0
        %1328 = vmatprep.subr.mxu0 0.0
        %1329 = vmatpush1.msra.mxu0 0.0
        %1330 = vmatprep.subr.mxu0 0.0
        %1331 = vmatpush1.msra.mxu0 0.0
        %1332 = vmatprep.subr.mxu0 0.0
        %1333 = vmatpush1.msra.mxu0 0.0
        %1334 = vmatprep.subr.mxu0 0.0
        %1335 = vmatpush1.msra.mxu0 0.0
        %1336 = vmatprep.subr.mxu0 0.0
        %1337 = vmatpush1.msra.mxu0 0.0
        %1338 = vmatprep.subr.mxu0 0.0
        %1339 = vmatpush1.msra.mxu0 0.0
        %1340 = vmatprep.subr.mxu0 0.0
        %1341 = vmatpush1.msra.mxu0 0.0
        %1342 = vmatprep.subr.mxu0 0.0
        %1343 = vmatpush1.msra.mxu0 0.0
        %1344 = vmatprep.subr.mxu0 0.0
        %1345 = vmatpush1.msra.mxu0 0.0
        %1346 = vmatprep.subr.mxu0 0.0
        %1347 = vmatpush1.msra.mxu0 0.0
        %1348 = vmatprep.subr.mxu0 0.0
        %1349 = vmatpush1.msra.mxu0 0.0
        %1350 = vmatprep.subr.mxu0 0.0
        %1351 = vmatpush1.msra.mxu0 0.0
        %1352 = vmatprep.subr.mxu0 0.0
        %1353 = vmatpush1.msra.mxu0 0.0
        %1354 = vmatprep.subr.mxu0 0.0
        %1355 = vmatpush1.msra.mxu0 0.0
        %1356 = vmatprep.subr.mxu0 0.0
        %1357 = vmatpush1.msra.mxu0 0.0
        %1358 = vmatprep.subr.mxu0 0.0
        %1359 = vmatpush1.msra.mxu0 0.0
        %1360 = vmatprep.subr.mxu0 0.0
        %1361 = vmatpush1.msra.mxu0 0.0
        %1362 = vmatprep.subr.mxu0 0.0
        %1363 = vmatpush1.msra.mxu0 0.0
        %1364 = vmatprep.subr.mxu0 0.0
        %1365 = vmatpush1.msra.mxu0 0.0
        %1366 = vmatprep.subr.mxu0 0.0
        %1367 = vmatpush1.msra.mxu0 0.0
        %1368 = vmatprep.subr.mxu0 0.0
        %1369 = vmatpush1.msra.mxu0 0.0
        %1370 = vmatprep.subr.mxu0 0.0
        %1371 = vmatpush1.msra.mxu0 0.0
        %1372 = vmatprep.mubr.f32.mxu0 0.0
        %v1373 = vand.u32 %v908, 4294901760
        %1374 = vmatmul.mubr.f32.gmra.mrb[0].mxu0 %v1373
        %v1375 = vpop.f32.mrb[0].mxu0
        %v1376 = vadd.f32 %v1302, %v1375
        %v1377 = vpop.f32.mrb[0].mxu0
        %v1378 = vadd.f32 %v1304, %v1377
        %1379 = vdwg.mxu0
        %1380 = vrot.lane.b32.xlu0 %v393, 127
        %v1381 = vpop.permute.xlu0 %1380
        %1382 = vrot.lane.b32.xlu0 %v424, 127
        %v1383 = vpop.permute.xlu0 %1382
        %vm1384 = vcmask 1039360
        %v1385 = vsel %vm1384, %v1381, %v1383
        %1388 = vrot.lane.b32.xlu0 %v419, 127
        %v1389 = vpop.permute.xlu0 %1388
        %v1391 = vsel %vm1384, %v1383, %v1389
        %v1393 = vsel %vm433, %v422, 0
        %v1395 = vsel %vm437, %v1385, 0
        %v1398 = vsel %vm437, %v1391, 0
        %v1400 = vand.u32 %v1398, 4294901760
        %1401 = vmatprep.subr.mxu0 %v1400
        %v1402 = vand.u32 %v1395, 4294901760
        %1403 = vmatpush1.msra.mxu0 %v1402
        %1404 = vmatprep.subr.mxu0 0.0
        %1405 = vmatpush1.msra.mxu0 0.0
        %1406 = vmatprep.subr.mxu0 0.0
        %1407 = vmatpush1.msra.mxu0 0.0
        %1408 = vmatprep.subr.mxu0 0.0
        %1409 = vmatpush1.msra.mxu0 0.0
        %1410 = vmatprep.subr.mxu0 0.0
        %1411 = vmatpush1.msra.mxu0 0.0
        %1412 = vmatprep.subr.mxu0 0.0
        %1413 = vmatpush1.msra.mxu0 0.0
        %1414 = vmatprep.subr.mxu0 0.0
        %1415 = vmatpush1.msra.mxu0 0.0
        %1416 = vmatprep.subr.mxu0 0.0
        %1417 = vmatpush1.msra.mxu0 0.0
        %1418 = vmatprep.subr.mxu0 0.0
        %1419 = vmatpush1.msra.mxu0 0.0
        %1420 = vmatprep.subr.mxu0 0.0
        %1421 = vmatpush1.msra.mxu0 0.0
        %1422 = vmatprep.subr.mxu0 0.0
        %1423 = vmatpush1.msra.mxu0 0.0
        %1424 = vmatprep.subr.mxu0 0.0
        %1425 = vmatpush1.msra.mxu0 0.0
        %1426 = vmatprep.subr.mxu0 0.0
        %1427 = vmatpush1.msra.mxu0 0.0
        %1428 = vmatprep.subr.mxu0 0.0
        %1429 = vmatpush1.msra.mxu0 0.0
        %1430 = vmatprep.subr.mxu0 0.0
        %1431 = vmatpush1.msra.mxu0 0.0
        %1432 = vmatprep.subr.mxu0 0.0
        %1433 = vmatpush1.msra.mxu0 0.0
        %1434 = vmatprep.subr.mxu0 0.0
        %1435 = vmatpush1.msra.mxu0 0.0
        %1436 = vmatprep.subr.mxu0 0.0
        %1437 = vmatpush1.msra.mxu0 0.0
        %1438 = vmatprep.subr.mxu0 0.0
        %1439 = vmatpush1.msra.mxu0 0.0
        %1440 = vmatprep.subr.mxu0 0.0
        %1441 = vmatpush1.msra.mxu0 0.0
        %1442 = vmatprep.subr.mxu0 0.0
        %1443 = vmatpush1.msra.mxu0 0.0
        %1444 = vmatprep.subr.mxu0 0.0
        %1445 = vmatpush1.msra.mxu0 0.0
        %1446 = vmatprep.subr.mxu0 0.0
        %1447 = vmatpush1.msra.mxu0 0.0
        %1448 = vmatprep.subr.mxu0 0.0
        %1449 = vmatpush1.msra.mxu0 0.0
        %1450 = vmatprep.subr.mxu0 0.0
        %1451 = vmatpush1.msra.mxu0 0.0
        %1452 = vmatprep.subr.mxu0 0.0
        %1453 = vmatpush1.msra.mxu0 0.0
        %1454 = vmatprep.subr.mxu0 0.0
        %1455 = vmatpush1.msra.mxu0 0.0
        %1456 = vmatprep.subr.mxu0 0.0
        %1457 = vmatpush1.msra.mxu0 0.0
        %1458 = vmatprep.subr.mxu0 0.0
        %1459 = vmatpush1.msra.mxu0 0.0
        %1460 = vmatprep.subr.mxu0 0.0
        %1461 = vmatpush1.msra.mxu0 0.0
        %1462 = vmatprep.subr.mxu0 0.0
        %1463 = vmatpush1.msra.mxu0 0.0
        %1464 = vmatprep.subr.mxu0 0.0
        %1465 = vmatpush1.msra.mxu0 0.0
        %1466 = vmatprep.mubr.f32.mxu0 0.0
        %v1467 = vand.u32 %v1393, 4294901760
        %v1468 = vsub.f32 %v1393, %v1467
        %v1469 = vand.u32 %v1468, 4294901760
        %v1470 = vsub.f32 %v1468, %v1469
        %v1471 = vand.u32 %v1470, 4294901760
        %1472 = vmatmul.mubr.f32.gmra.mrb[0].mxu0 %v1471
        %v1473 = vpop.f32.mrb[0].mxu0
        %v1474 = vadd.f32 0.0, %v1473
        %v1475 = vpop.f32.mrb[0].mxu0
        %v1476 = vadd.f32 0.0, %v1475
        %1477 = vdwg.mxu0
        %v1478 = vand.u32 %v1398, 4294901760
        %v1479 = vsub.f32 %v1398, %v1478
        %v1480 = vand.u32 %v1479, 4294901760
        %v1481 = vsub.f32 %v1479, %v1480
        %v1482 = vand.u32 %v1481, 4294901760
        %1483 = vmatprep.subr.mxu0 %v1482
        %v1484 = vand.u32 %v1395, 4294901760
        %v1485 = vsub.f32 %v1395, %v1484
        %v1486 = vand.u32 %v1485, 4294901760
        %v1487 = vsub.f32 %v1485, %v1486
        %v1488 = vand.u32 %v1487, 4294901760
        %1489 = vmatpush1.msra.mxu0 %v1488
        %1490 = vmatprep.subr.mxu0 0.0
        %1491 = vmatpush1.msra.mxu0 0.0
        %1492 = vmatprep.subr.mxu0 0.0
        %1493 = vmatpush1.msra.mxu0 0.0
        %1494 = vmatprep.subr.mxu0 0.0
        %1495 = vmatpush1.msra.mxu0 0.0
        %1496 = vmatprep.subr.mxu0 0.0
        %1497 = vmatpush1.msra.mxu0 0.0
        %1498 = vmatprep.subr.mxu0 0.0
        %1499 = vmatpush1.msra.mxu0 0.0
        %1500 = vmatprep.subr.mxu0 0.0
        %1501 = vmatpush1.msra.mxu0 0.0
        %1502 = vmatprep.subr.mxu0 0.0
        %1503 = vmatpush1.msra.mxu0 0.0
        %1504 = vmatprep.subr.mxu0 0.0
        %1505 = vmatpush1.msra.mxu0 0.0
        %1506 = vmatprep.subr.mxu0 0.0
        %1507 = vmatpush1.msra.mxu0 0.0
        %1508 = vmatprep.subr.mxu0 0.0
        %1509 = vmatpush1.msra.mxu0 0.0
        %1510 = vmatprep.subr.mxu0 0.0
        %1511 = vmatpush1.msra.mxu0 0.0
        %1512 = vmatprep.subr.mxu0 0.0
        %1513 = vmatpush1.msra.mxu0 0.0
        %1514 = vmatprep.subr.mxu0 0.0
        %1515 = vmatpush1.msra.mxu0 0.0
        %1516 = vmatprep.subr.mxu0 0.0
        %1517 = vmatpush1.msra.mxu0 0.0
        %1518 = vmatprep.subr.mxu0 0.0
        %1519 = vmatpush1.msra.mxu0 0.0
        %1520 = vmatprep.subr.mxu0 0.0
        %1521 = vmatpush1.msra.mxu0 0.0
        %1522 = vmatprep.subr.mxu0 0.0
        %1523 = vmatpush1.msra.mxu0 0.0
        %1524 = vmatprep.subr.mxu0 0.0
        %1525 = vmatpush1.msra.mxu0 0.0
        %1526 = vmatprep.subr.mxu0 0.0
        %1527 = vmatpush1.msra.mxu0 0.0
        %1528 = vmatprep.subr.mxu0 0.0
        %1529 = vmatpush1.msra.mxu0 0.0
        %1530 = vmatprep.subr.mxu0 0.0
        %1531 = vmatpush1.msra.mxu0 0.0
        %1532 = vmatprep.subr.mxu0 0.0
        %1533 = vmatpush1.msra.mxu0 0.0
        %1534 = vmatprep.subr.mxu0 0.0
        %1535 = vmatpush1.msra.mxu0 0.0
        %1536 = vmatprep.subr.mxu0 0.0
        %1537 = vmatpush1.msra.mxu0 0.0
        %1538 = vmatprep.subr.mxu0 0.0
        %1539 = vmatpush1.msra.mxu0 0.0
        %1540 = vmatprep.subr.mxu0 0.0
        %1541 = vmatpush1.msra.mxu0 0.0
        %1542 = vmatprep.subr.mxu0 0.0
        %1543 = vmatpush1.msra.mxu0 0.0
        %1544 = vmatprep.subr.mxu0 0.0
        %1545 = vmatpush1.msra.mxu0 0.0
        %1546 = vmatprep.subr.mxu0 0.0
        %1547 = vmatpush1.msra.mxu0 0.0
        %1548 = vmatprep.subr.mxu0 0.0
        %1549 = vmatpush1.msra.mxu0 0.0
        %1550 = vmatprep.subr.mxu0 0.0
        %1551 = vmatpush1.msra.mxu0 0.0
        %1552 = vmatprep.mubr.f32.mxu0 0.0
        %v1553 = vand.u32 %v1393, 4294901760
        %1554 = vmatmul.mubr.f32.gmra.mrb[0].mxu0 %v1553
        %v1555 = vpop.f32.mrb[0].mxu0
        %v1556 = vadd.f32 %v1474, %v1555
        %v1557 = vpop.f32.mrb[0].mxu0
        %v1558 = vadd.f32 %v1476, %v1557
        %1559 = vdwg.mxu0
        %v1560 = vand.u32 %v1398, 4294901760
        %v1561 = vsub.f32 %v1398, %v1560
        %1562 = vmatprep.subr.mxu0 %v1561
        %v1563 = vand.u32 %v1395, 4294901760
        %v1564 = vsub.f32 %v1395, %v1563
        %1565 = vmatpush1.msra.mxu0 %v1564
        %1566 = vmatprep.subr.mxu0 0.0
        %1567 = vmatpush1.msra.mxu0 0.0
        %1568 = vmatprep.subr.mxu0 0.0
        %1569 = vmatpush1.msra.mxu0 0.0
        %1570 = vmatprep.subr.mxu0 0.0
        %1571 = vmatpush1.msra.mxu0 0.0
        %1572 = vmatprep.subr.mxu0 0.0
        %1573 = vmatpush1.msra.mxu0 0.0
        %1574 = vmatprep.subr.mxu0 0.0
        %1575 = vmatpush1.msra.mxu0 0.0
        %1576 = vmatprep.subr.mxu0 0.0
        %1577 = vmatpush1.msra.mxu0 0.0
        %1578 = vmatprep.subr.mxu0 0.0
        %1579 = vmatpush1.msra.mxu0 0.0
        %1580 = vmatprep.subr.mxu0 0.0
        %1581 = vmatpush1.msra.mxu0 0.0
        %1582 = vmatprep.subr.mxu0 0.0
        %1583 = vmatpush1.msra.mxu0 0.0
        %1584 = vmatprep.subr.mxu0 0.0
        %1585 = vmatpush1.msra.mxu0 0.0
        %1586 = vmatprep.subr.mxu0 0.0
        %1587 = vmatpush1.msra.mxu0 0.0
        %1588 = vmatprep.subr.mxu0 0.0
        %1589 = vmatpush1.msra.mxu0 0.0
        %1590 = vmatprep.subr.mxu0 0.0
        %1591 = vmatpush1.msra.mxu0 0.0
        %1592 = vmatprep.subr.mxu0 0.0
        %1593 = vmatpush1.msra.mxu0 0.0
        %1594 = vmatprep.subr.mxu0 0.0
        %1595 = vmatpush1.msra.mxu0 0.0
        %1596 = vmatprep.subr.mxu0 0.0
        %1597 = vmatpush1.msra.mxu0 0.0
        %1598 = vmatprep.subr.mxu0 0.0
        %1599 = vmatpush1.msra.mxu0 0.0
        %1600 = vmatprep.subr.mxu0 0.0
        %1601 = vmatpush1.msra.mxu0 0.0
        %1602 = vmatprep.subr.mxu0 0.0
        %1603 = vmatpush1.msra.mxu0 0.0
        %1604 = vmatprep.subr.mxu0 0.0
        %1605 = vmatpush1.msra.mxu0 0.0
        %1606 = vmatprep.subr.mxu0 0.0
        %1607 = vmatpush1.msra.mxu0 0.0
        %1608 = vmatprep.subr.mxu0 0.0
        %1609 = vmatpush1.msra.mxu0 0.0
        %1610 = vmatprep.subr.mxu0 0.0
        %1611 = vmatpush1.msra.mxu0 0.0
        %1612 = vmatprep.subr.mxu0 0.0
        %1613 = vmatpush1.msra.mxu0 0.0
        %1614 = vmatprep.subr.mxu0 0.0
        %1615 = vmatpush1.msra.mxu0 0.0
        %1616 = vmatprep.subr.mxu0 0.0
        %1617 = vmatpush1.msra.mxu0 0.0
        %1618 = vmatprep.subr.mxu0 0.0
        %1619 = vmatpush1.msra.mxu0 0.0
        %1620 = vmatprep.subr.mxu0 0.0
        %1621 = vmatpush1.msra.mxu0 0.0
        %1622 = vmatprep.subr.mxu0 0.0
        %1623 = vmatpush1.msra.mxu0 0.0
        %1624 = vmatprep.subr.mxu0 0.0
        %1625 = vmatpush1.msra.mxu0 0.0
        %1626 = vmatprep.subr.mxu0 0.0
        %1627 = vmatpush1.msra.mxu0 0.0
        %1628 = vmatprep.mubr.f32.mxu0 0.0
        %v1629 = vand.u32 %v1393, 4294901760
        %v1630 = vsub.f32 %v1393, %v1629
        %1631 = vmatmul.mubr.f32.gmra.mrb[0].mxu0 %v1630
        %v1632 = vpop.f32.mrb[0].mxu0
        %v1633 = vadd.f32 %v1556, %v1632
        %v1634 = vpop.f32.mrb[0].mxu0
        %v1635 = vadd.f32 %v1558, %v1634
        %1636 = vdwg.mxu0
        %v1637 = vand.u32 %v1398, 4294901760
        %1638 = vmatprep.subr.mxu0 %v1637
        %v1639 = vand.u32 %v1395, 4294901760
        %1640 = vmatpush1.msra.mxu0 %v1639
        %1641 = vmatprep.subr.mxu0 0.0
        %1642 = vmatpush1.msra.mxu0 0.0
        %1643 = vmatprep.subr.mxu0 0.0
        %1644 = vmatpush1.msra.mxu0 0.0
        %1645 = vmatprep.subr.mxu0 0.0
        %1646 = vmatpush1.msra.mxu0 0.0
        %1647 = vmatprep.subr.mxu0 0.0
        %1648 = vmatpush1.msra.mxu0 0.0
        %1649 = vmatprep.subr.mxu0 0.0
        %1650 = vmatpush1.msra.mxu0 0.0
        %1651 = vmatprep.subr.mxu0 0.0
        %1652 = vmatpush1.msra.mxu0 0.0
        %1653 = vmatprep.subr.mxu0 0.0
        %1654 = vmatpush1.msra.mxu0 0.0
        %1655 = vmatprep.subr.mxu0 0.0
        %1656 = vmatpush1.msra.mxu0 0.0
        %1657 = vmatprep.subr.mxu0 0.0
        %1658 = vmatpush1.msra.mxu0 0.0
        %1659 = vmatprep.subr.mxu0 0.0
        %1660 = vmatpush1.msra.mxu0 0.0
        %1661 = vmatprep.subr.mxu0 0.0
        %1662 = vmatpush1.msra.mxu0 0.0
        %1663 = vmatprep.subr.mxu0 0.0
        %1664 = vmatpush1.msra.mxu0 0.0
        %1665 = vmatprep.subr.mxu0 0.0
        %1666 = vmatpush1.msra.mxu0 0.0
        %1667 = vmatprep.subr.mxu0 0.0
        %1668 = vmatpush1.msra.mxu0 0.0
        %1669 = vmatprep.subr.mxu0 0.0
        %1670 = vmatpush1.msra.mxu0 0.0
        %1671 = vmatprep.subr.mxu0 0.0
        %1672 = vmatpush1.msra.mxu0 0.0
        %1673 = vmatprep.subr.mxu0 0.0
        %1674 = vmatpush1.msra.mxu0 0.0
        %1675 = vmatprep.subr.mxu0 0.0
        %1676 = vmatpush1.msra.mxu0 0.0
        %1677 = vmatprep.subr.mxu0 0.0
        %1678 = vmatpush1.msra.mxu0 0.0
        %1679 = vmatprep.subr.mxu0 0.0
        %1680 = vmatpush1.msra.mxu0 0.0
        %1681 = vmatprep.subr.mxu0 0.0
        %1682 = vmatpush1.msra.mxu0 0.0
        %1683 = vmatprep.subr.mxu0 0.0
        %1684 = vmatpush1.msra.mxu0 0.0
        %1685 = vmatprep.subr.mxu0 0.0
        %1686 = vmatpush1.msra.mxu0 0.0
        %1687 = vmatprep.subr.mxu0 0.0
        %1688 = vmatpush1.msra.mxu0 0.0
        %1689 = vmatprep.subr.mxu0 0.0
        %1690 = vmatpush1.msra.mxu0 0.0
        %1691 = vmatprep.subr.mxu0 0.0
        %1692 = vmatpush1.msra.mxu0 0.0
        %1693 = vmatprep.subr.mxu0 0.0
        %1694 = vmatpush1.msra.mxu0 0.0
        %1695 = vmatprep.subr.mxu0 0.0
        %1696 = vmatpush1.msra.mxu0 0.0
        %1697 = vmatprep.subr.mxu0 0.0
        %1698 = vmatpush1.msra.mxu0 0.0
        %1699 = vmatprep.subr.mxu0 0.0
        %1700 = vmatpush1.msra.mxu0 0.0
        %1701 = vmatprep.subr.mxu0 0.0
        %1702 = vmatpush1.msra.mxu0 0.0
        %1703 = vmatprep.mubr.f32.mxu0 0.0
        %v1704 = vand.u32 %v1393, 4294901760
        %v1705 = vsub.f32 %v1393, %v1704
        %v1706 = vand.u32 %v1705, 4294901760
        %1707 = vmatmul.mubr.f32.gmra.mrb[0].mxu0 %v1706
        %v1708 = vpop.f32.mrb[0].mxu0
        %v1709 = vadd.f32 %v1633, %v1708
        %v1710 = vpop.f32.mrb[0].mxu0
        %v1711 = vadd.f32 %v1635, %v1710
        %1712 = vdwg.mxu0
        %v1713 = vand.u32 %v1398, 4294901760
        %v1714 = vsub.f32 %v1398, %v1713
        %v1715 = vand.u32 %v1714, 4294901760
        %1716 = vmatprep.subr.mxu0 %v1715
        %v1717 = vand.u32 %v1395, 4294901760
        %v1718 = vsub.f32 %v1395, %v1717
        %v1719 = vand.u32 %v1718, 4294901760
        %1720 = vmatpush1.msra.mxu0 %v1719
        %1721 = vmatprep.subr.mxu0 0.0
        %1722 = vmatpush1.msra.mxu0 0.0
        %1723 = vmatprep.subr.mxu0 0.0
        %1724 = vmatpush1.msra.mxu0 0.0
        %1725 = vmatprep.subr.mxu0 0.0
        %1726 = vmatpush1.msra.mxu0 0.0
        %1727 = vmatprep.subr.mxu0 0.0
        %1728 = vmatpush1.msra.mxu0 0.0
        %1729 = vmatprep.subr.mxu0 0.0
        %1730 = vmatpush1.msra.mxu0 0.0
        %1731 = vmatprep.subr.mxu0 0.0
        %1732 = vmatpush1.msra.mxu0 0.0
        %1733 = vmatprep.subr.mxu0 0.0
        %1734 = vmatpush1.msra.mxu0 0.0
        %1735 = vmatprep.subr.mxu0 0.0
        %1736 = vmatpush1.msra.mxu0 0.0
        %1737 = vmatprep.subr.mxu0 0.0
        %1738 = vmatpush1.msra.mxu0 0.0
        %1739 = vmatprep.subr.mxu0 0.0
        %1740 = vmatpush1.msra.mxu0 0.0
        %1741 = vmatprep.subr.mxu0 0.0
        %1742 = vmatpush1.msra.mxu0 0.0
        %1743 = vmatprep.subr.mxu0 0.0
        %1744 = vmatpush1.msra.mxu0 0.0
        %1745 = vmatprep.subr.mxu0 0.0
        %1746 = vmatpush1.msra.mxu0 0.0
        %1747 = vmatprep.subr.mxu0 0.0
        %1748 = vmatpush1.msra.mxu0 0.0
        %1749 = vmatprep.subr.mxu0 0.0
        %1750 = vmatpush1.msra.mxu0 0.0
        %1751 = vmatprep.subr.mxu0 0.0
        %1752 = vmatpush1.msra.mxu0 0.0
        %1753 = vmatprep.subr.mxu0 0.0
        %1754 = vmatpush1.msra.mxu0 0.0
        %1755 = vmatprep.subr.mxu0 0.0
        %1756 = vmatpush1.msra.mxu0 0.0
        %1757 = vmatprep.subr.mxu0 0.0
        %1758 = vmatpush1.msra.mxu0 0.0
        %1759 = vmatprep.subr.mxu0 0.0
        %1760 = vmatpush1.msra.mxu0 0.0
        %1761 = vmatprep.subr.mxu0 0.0
        %1762 = vmatpush1.msra.mxu0 0.0
        %1763 = vmatprep.subr.mxu0 0.0
        %1764 = vmatpush1.msra.mxu0 0.0
        %1765 = vmatprep.subr.mxu0 0.0
        %1766 = vmatpush1.msra.mxu0 0.0
        %1767 = vmatprep.subr.mxu0 0.0
        %1768 = vmatpush1.msra.mxu0 0.0
        %1769 = vmatprep.subr.mxu0 0.0
        %1770 = vmatpush1.msra.mxu0 0.0
        %1771 = vmatprep.subr.mxu0 0.0
        %1772 = vmatpush1.msra.mxu0 0.0
        %1773 = vmatprep.subr.mxu0 0.0
        %1774 = vmatpush1.msra.mxu0 0.0
        %1775 = vmatprep.subr.mxu0 0.0
        %1776 = vmatpush1.msra.mxu0 0.0
        %1777 = vmatprep.subr.mxu0 0.0
        %1778 = vmatpush1.msra.mxu0 0.0
        %1779 = vmatprep.subr.mxu0 0.0
        %1780 = vmatpush1.msra.mxu0 0.0
        %1781 = vmatprep.subr.mxu0 0.0
        %1782 = vmatpush1.msra.mxu0 0.0
        %1783 = vmatprep.mubr.f32.mxu0 0.0
        %v1784 = vand.u32 %v1393, 4294901760
        %1785 = vmatmul.mubr.f32.gmra.mrb[0].mxu0 %v1784
        %v1786 = vpop.f32.mrb[0].mxu0
        %v1787 = vadd.f32 %v1709, %v1786
        %v1788 = vpop.f32.mrb[0].mxu0
        %v1789 = vadd.f32 %v1711, %v1788
        %1790 = vdwg.mxu0
        %v1791 = vand.u32 %v1398, 4294901760
        %1792 = vmatprep.subr.mxu0 %v1791
        %v1793 = vand.u32 %v1395, 4294901760
        %1794 = vmatpush1.msra.mxu0 %v1793
        %1795 = vmatprep.subr.mxu0 0.0
        %1796 = vmatpush1.msra.mxu0 0.0
        %1797 = vmatprep.subr.mxu0 0.0
        %1798 = vmatpush1.msra.mxu0 0.0
        %1799 = vmatprep.subr.mxu0 0.0
        %1800 = vmatpush1.msra.mxu0 0.0
        %1801 = vmatprep.subr.mxu0 0.0
        %1802 = vmatpush1.msra.mxu0 0.0
        %1803 = vmatprep.subr.mxu0 0.0
        %1804 = vmatpush1.msra.mxu0 0.0
        %1805 = vmatprep.subr.mxu0 0.0
        %1806 = vmatpush1.msra.mxu0 0.0
        %1807 = vmatprep.subr.mxu0 0.0
        %1808 = vmatpush1.msra.mxu0 0.0
        %1809 = vmatprep.subr.mxu0 0.0
        %1810 = vmatpush1.msra.mxu0 0.0
        %1811 = vmatprep.subr.mxu0 0.0
        %1812 = vmatpush1.msra.mxu0 0.0
        %1813 = vmatprep.subr.mxu0 0.0
        %1814 = vmatpush1.msra.mxu0 0.0
        %1815 = vmatprep.subr.mxu0 0.0
        %1816 = vmatpush1.msra.mxu0 0.0
        %1817 = vmatprep.subr.mxu0 0.0
        %1818 = vmatpush1.msra.mxu0 0.0
        %1819 = vmatprep.subr.mxu0 0.0
        %1820 = vmatpush1.msra.mxu0 0.0
        %1821 = vmatprep.subr.mxu0 0.0
        %1822 = vmatpush1.msra.mxu0 0.0
        %1823 = vmatprep.subr.mxu0 0.0
        %1824 = vmatpush1.msra.mxu0 0.0
        %1825 = vmatprep.subr.mxu0 0.0
        %1826 = vmatpush1.msra.mxu0 0.0
        %1827 = vmatprep.subr.mxu0 0.0
        %1828 = vmatpush1.msra.mxu0 0.0
        %1829 = vmatprep.subr.mxu0 0.0
        %1830 = vmatpush1.msra.mxu0 0.0
        %1831 = vmatprep.subr.mxu0 0.0
        %1832 = vmatpush1.msra.mxu0 0.0
        %1833 = vmatprep.subr.mxu0 0.0
        %1834 = vmatpush1.msra.mxu0 0.0
        %1835 = vmatprep.subr.mxu0 0.0
        %1836 = vmatpush1.msra.mxu0 0.0
        %1837 = vmatprep.subr.mxu0 0.0
        %1838 = vmatpush1.msra.mxu0 0.0
        %1839 = vmatprep.subr.mxu0 0.0
        %1840 = vmatpush1.msra.mxu0 0.0
        %1841 = vmatprep.subr.mxu0 0.0
        %1842 = vmatpush1.msra.mxu0 0.0
        %1843 = vmatprep.subr.mxu0 0.0
        %1844 = vmatpush1.msra.mxu0 0.0
        %1845 = vmatprep.subr.mxu0 0.0
        %1846 = vmatpush1.msra.mxu0 0.0
        %1847 = vmatprep.subr.mxu0 0.0
        %1848 = vmatpush1.msra.mxu0 0.0
        %1849 = vmatprep.subr.mxu0 0.0
        %1850 = vmatpush1.msra.mxu0 0.0
        %1851 = vmatprep.subr.mxu0 0.0
        %1852 = vmatpush1.msra.mxu0 0.0
        %1853 = vmatprep.subr.mxu0 0.0
        %1854 = vmatpush1.msra.mxu0 0.0
        %1855 = vmatprep.subr.mxu0 0.0
        %1856 = vmatpush1.msra.mxu0 0.0
        %1857 = vmatprep.mubr.f32.mxu0 0.0
        %v1858 = vand.u32 %v1393, 4294901760
        %1859 = vmatmul.mubr.f32.gmra.mrb[0].mxu0 %v1858
        %v1860 = vpop.f32.mrb[0].mxu0
        %v1861 = vadd.f32 %v1787, %v1860
        %v1862 = vpop.f32.mrb[0].mxu0
        %v1863 = vadd.f32 %v1789, %v1862
        %1864 = vdwg.mxu0
        %v1865 = vadd.f32 %v1376, %v1861
        %v1866 = vadd.f32 %v1378, %v1863
        %1867 = vst [vmem:[%s347] sm:$0xff] %v1865
        %1868 = vst [vmem:[%s347 + $0x8] sm:$0xff] %v1866
        %s1869 = sand.u32 %s180, 1
        %s1870 = scalar_lea.sflag [#allocation4], %s1869
        %s1871 = sand.u32 %s180, 1
        %s1872 = smul.addr %s1871, 16
        %s1873 = scalar_lea.vmem [#allocation5], %s1872
        // Predicated region
        $region41: #{tpu_custom_call.1} parent=35 // pred_check
          %p1874 = pneg %p190
        $region42: #{tpu_custom_call.1} parent=35 // pred_check_branch
          %1876 = sbr.rel (%p1874) target = $region44
        $region43: #{tpu_custom_call.1} parent=35 // pred_region
          %s1877 = smul.u32 2, %s26
          %s1879 = ssub.s32 256, 256
          %1880 = vsyncadd %s1870, %s1879
          %s1881 = smul.addr %s25, 2
          %s1882 = sadd.s32 %s1877, %s1881
          %s1883 = smul.addr %s1882, 128
          %s1884 = scalar_lea.hbm %s4, %s1883
          %s1886 = sshll.u32 %s1873, 4
          %s1887 = int_to_ptr.vmem [resolvable:$true] %s1886
          %1889 = dma.vmem_to_hbm [thread:$0]  %s1887, 256, %s1884, %s1870
        $region44: #{tpu_custom_call.1} parent=35 // pred_fallthru
          _
      $region36: #{tpu_custom_call.1} parent=5 // pred_fallthru
        _
      %p1890 = scmp.le.s32.totalorder 2, %s16
      // Predicated region
      $region45: #{tpu_custom_call.1} parent=5 // pred_check
        %p1891 = pneg %p1890
      $region46: #{tpu_custom_call.1} parent=5 // pred_check_branch
        %1893 = sbr.rel (%p1891) target = $region48
      $region47: #{tpu_custom_call.1} parent=5 // pred_region
        %s1894 = ssub.s32 %s16, 2
        // Predicated region
        $region49: #{tpu_custom_call.1} parent=47 // pred_check
          %p1895 = pneg %p196
        $region50: #{tpu_custom_call.1} parent=47 // pred_check_branch
          %1897 = sbr.rel (%p1895) target = $region52
        $region51: #{tpu_custom_call.1} parent=47 // pred_region
          %s1898 = sand.u32 %s181, 1
          %s1899 = scalar_lea.sflag [#allocation4], %s1898
          %s1900 = sand.u32 %s181, 1
          %s1901 = smul.addr %s1900, 16
          %s1902 = scalar_lea.vmem [#allocation5], %s1901
          %1903 = dma.done %s1899, 256
        $region52: #{tpu_custom_call.1} parent=47 // pred_fallthru
          _
      $region48: #{tpu_custom_call.1} parent=5 // pred_fallthru
        _
    $region6: #{tpu_custom_call.1} parent=1 // loop_footer
      %s20 = sadd.s32 1, %s16
    $region7: #{tpu_custom_call.1} parent=1 // loop_footer_branch
      %15 = sbr.rel target = $region3
    $region8: #{tpu_custom_call.1} parent=1 // loop_exit
      _
    %1904 = vsyncpa [#allocation3], 1
    %s1905 = scalar_lea.sflag [#allocation3], 1
    %1906 = vsyncpa %s1905, 1
    %1907 = vsyncpa [#allocation4], 1
    %s1908 = scalar_lea.sflag [#allocation4], 1
    %1909 = vsyncpa %s1908, 1

</llo_original>
